<compile_context>
chip_gen: v5e
topology: v5e:2x2
jax: 0.10.0
libtpu: 0.0.40
codegen_flags: <defaults>
</compile_context>

<pallas_src>
import jax
import jax.numpy as jnp
from jax import lax
from jax.experimental import pallas as pl
from jax.experimental.pallas import tpu as pltpu


# ----------------------------- fused Pallas kernel ----------------------------- #

def _gcn_fused_kernel(a_ref, x_ref,
                      w1_ref, b1_ref,
                      w2a_ref, w2b_ref, b2_ref,
                      w3a_ref, w3b_ref, b3_ref,
                      w4_ref, b4_ref, cls_ref,
                      out_ref, pred_ref, crit_ref):
    g = pl.program_id(0)                     # graph index (grid axis, "parallel")
    npg = a_ref.shape[-1]                    # nodes per graph
    f32 = jnp.float32
    bf16 = jnp.bfloat16

    a = a_ref[...]                           # (npg, npg) bf16, A[dst, src]
    x = x_ref[...]                           # (npg, 128) bf16, [norm | pos | 0-pad]

    # ---- conv1: h1 = relu(A @ (x @ W1) + b1) ---------------------------------
    z1 = jnp.dot(x, w1_ref[...], preferred_element_type=f32)
    h1 = jnp.maximum(
        jnp.dot(a, z1.astype(bf16), preferred_element_type=f32) + b1_ref[...], 0.0)

    # ---- conv2: cat([h1, x]) @ W2 == h1 @ W2a + x @ W2b ----------------------
    z2 = (jnp.dot(h1.astype(bf16), w2a_ref[...], preferred_element_type=f32)
          + jnp.dot(x, w2b_ref[...], preferred_element_type=f32))
    h2 = jnp.maximum(
        jnp.dot(a, z2.astype(bf16), preferred_element_type=f32) + b2_ref[...], 0.0)

    # ---- conv3: cat([h2, x]) @ W3 == h2 @ W3a + x @ W3b ----------------------
    z3 = (jnp.dot(h2.astype(bf16), w3a_ref[...], preferred_element_type=f32)
          + jnp.dot(x, w3b_ref[...], preferred_element_type=f32))
    h3 = jnp.maximum(
        jnp.dot(a, z3.astype(bf16), preferred_element_type=f32) + b3_ref[...], 0.0)
    # h3: (npg, 256) f32

    # ---- global_max_pool + critical points (per-feature argmax node id) ------
    pooled = jnp.max(h3, axis=0, keepdims=True)                      # (1, 256)
    node_iota = lax.broadcasted_iota(jnp.int32, h3.shape, 0)
    hit = h3 >= pooled
    local_idx = jnp.min(jnp.where(hit, node_iota, jnp.int32(2 ** 30)),
                        axis=0, keepdims=True)                       # first argmax
    crit = local_idx + g * npg                                       # global node id

    # ---- lin1 + log_softmax over valid class lanes ---------------------------
    pooled8 = jnp.broadcast_to(pooled, (8, pooled.shape[1]))         # full sublane tile
    logits = jnp.dot(pooled8, w4_ref[...], preferred_element_type=f32) + b4_ref[...]
    valid = cls_ref[...] > 0.0                                       # (1, C_P)
    neg = jnp.float32(-1e30)
    mx = jnp.max(jnp.where(valid, logits, neg), axis=1, keepdims=True)
    shifted = logits - mx
    exps = jnp.where(valid, jnp.exp(shifted), 0.0)
    lse = jnp.log(jnp.sum(exps, axis=1, keepdims=True))
    logp = shifted - lse                                             # (8, C_P)

    # Full-tile, lane-dense, unmasked stores (one per output per grid step).
    out_ref[...] = logp
    pred_ref[...] = jnp.where(valid, jnp.exp(logp), 0.0)
    crit_ref[...] = jnp.broadcast_to(crit, (8, crit.shape[1]))


# ----------------------------- wrapper ----------------------------------------- #

def _gcn_forward_impl(params, norm, pos, batch, edge_index, n_graphs):
    # TODO(synk): assumes a standard PyG mini-batch of equal-sized graphs with a
    # contiguous, sorted `batch` vector and intra-graph edges (block-diagonal A).
    # Ragged batches / a single huge graph would need per-graph padding or an
    # edge-list/CSR scalar-prefetch gather formulation.
    del batch
    num_nodes = pos.shape[0]
    npg = num_nodes // n_graphs

    x_in = jnp.concatenate([norm, pos], axis=1)                      # (N, 6)
    fin = x_in.shape[1]
    FIN_P = 128
    F1, F2, F3 = 64, 128, 256
    F1_P = 128
    C = params["w4"].shape[1]
    C_P = 128
    bf16 = jnp.bfloat16

    # Node features, lane-padded to 128, reshaped to per-graph blocks.
    x_p = jnp.zeros((num_nodes, FIN_P), jnp.float32).at[:, :fin].set(x_in)
    x_blk = x_p.reshape(n_graphs, npg, FIN_P).astype(bf16)

    # Per-graph dense adjacency blocks A[g, dst_local, src_local] (unit edge
    # weights, multiplicities via scatter-add).  Only O(B*npg^2), never N x N.
    src, dst = edge_index[0], edge_index[1]
    a_blk = jnp.zeros((n_graphs, npg, npg), jnp.float32)
    a_blk = a_blk.at[dst // npg, dst % npg, src % npg].add(1.0).astype(bf16)

    # Weights: pad to lane multiples of 128, split W2/W3 to fold the concats.
    w1 = jnp.zeros((FIN_P, F1_P), jnp.float32).at[:fin, :F1].set(params["w1"]).astype(bf16)
    b1 = jnp.zeros((1, F1_P), jnp.float32).at[0, :F1].set(params["b1"])

    w2 = params["w2"]                                                # (70, 128)
    w2a = jnp.zeros((F1_P, F2), jnp.float32).at[:F1, :].set(w2[:F1]).astype(bf16)
    w2b = jnp.zeros((FIN_P, F2), jnp.float32).at[:fin, :].set(w2[F1:]).astype(bf16)
    b2 = params["b2"].reshape(1, F2)

    w3 = params["w3"]                                                # (134, 256)
    w3a = w3[:F2].astype(bf16)                                       # (128, 256)
    w3b = jnp.zeros((FIN_P, F3), jnp.float32).at[:fin, :].set(w3[F2:]).astype(bf16)
    b3 = params["b3"].reshape(1, F3)

    w4 = jnp.zeros((F3, C_P), jnp.float32).at[:, :C].set(params["w4"])   # head kept f32
    b4 = jnp.zeros((1, C_P), jnp.float32).at[0, :C].set(params["b4"])
    clsmask = (jnp.arange(C_P) < C).astype(jnp.float32).reshape(1, C_P)

    out3, pred3, crit3 = pl.pallas_call(
        _gcn_fused_kernel,
        out_shape=(
            jax.ShapeDtypeStruct((n_graphs, 8, C_P), jnp.float32),
            jax.ShapeDtypeStruct((n_graphs, 8, C_P), jnp.float32),
            jax.ShapeDtypeStruct((n_graphs, 8, F3), jnp.int32),
        ),
        grid=(n_graphs,),
        in_specs=[
            pl.BlockSpec((None, npg, npg), lambda g: (g, 0, 0)),     # A block (streamed)
            pl.BlockSpec((None, npg, FIN_P), lambda g: (g, 0, 0)),   # X block (streamed)
            pl.BlockSpec((FIN_P, F1_P), lambda g: (0, 0)),           # W1   (resident)
            pl.BlockSpec((1, F1_P), lambda g: (0, 0)),               # b1
            pl.BlockSpec((F1_P, F2), lambda g: (0, 0)),              # W2a
            pl.BlockSpec((FIN_P, F2), lambda g: (0, 0)),             # W2b
            pl.BlockSpec((1, F2), lambda g: (0, 0)),                 # b2
            pl.BlockSpec((F2, F3), lambda g: (0, 0)),                # W3a
            pl.BlockSpec((FIN_P, F3), lambda g: (0, 0)),             # W3b
            pl.BlockSpec((1, F3), lambda g: (0, 0)),                 # b3
            pl.BlockSpec((F3, C_P), lambda g: (0, 0)),               # W4
            pl.BlockSpec((1, C_P), lambda g: (0, 0)),                # b4
            pl.BlockSpec((1, C_P), lambda g: (0, 0)),                # class mask
        ],
        out_specs=(
            pl.BlockSpec((None, 8, C_P), lambda g: (g, 0, 0)),       # log-probs
            pl.BlockSpec((None, 8, C_P), lambda g: (g, 0, 0)),       # probs
            pl.BlockSpec((None, 8, F3), lambda g: (g, 0, 0)),        # critical points
        ),
        compiler_params=pltpu.CompilerParams(
            dimension_semantics=("parallel",)),                      # megacore on v7x
    )(a_blk, x_blk, w1, b1, w2a, w2b, b2, w3a, w3b, b3, w4, b4, clsmask)

    out = out3[:, 0, :C]
    pred = pred3[:, 0, :C]
    critical_points = crit3[:, 0, :]
    return out, pred, critical_points


gcn_forward = jax.jit(_gcn_forward_impl, static_argnames=("n_graphs",))


# ----------------------------- params ------------------------------------------ #

def init_params(key, num_classes):
    ks = jax.random.split(key, 8)

    def dense(k, fin, fout):
        return jax.random.normal(k, (fin, fout), jnp.float32) / jnp.sqrt(float(fin))

    return {
        "w1": dense(ks[0], 6, 64),
        "b1": 0.01 * jax.random.normal(ks[1], (64,), jnp.float32),
        "w2": dense(ks[2], 64 + 6, 128),
        "b2": 0.01 * jax.random.normal(ks[3], (128,), jnp.float32),
        "w3": dense(ks[4], 128 + 6, 256),
        "b3": 0.01 * jax.random.normal(ks[5], (256,), jnp.float32),
        "w4": dense(ks[6], 256, num_classes),
        "b4": 0.01 * jax.random.normal(ks[7], (num_classes,), jnp.float32),
    }


# ----------------------------- main --------------------------------------------- #

if __name__ == "__main__":
    key = jax.random.PRNGKey(0)
    k_pos, k_norm, k_edge, k_par = jax.random.split(key, 4)

    n_graphs = 2
    nodes_per_graph = 32
    num_nodes = n_graphs * nodes_per_graph
    num_classes = 4
    out_degree = 4

    pos = jax.random.uniform(k_pos, (num_nodes, 3), jnp.float32)
    nrm = jax.random.normal(k_norm, (num_nodes, 3), jnp.float32)
    nrm = nrm / jnp.linalg.norm(nrm, axis=1, keepdims=True)
    batch = jnp.repeat(jnp.arange(n_graphs, dtype=jnp.int32), nodes_per_graph)

    # Random intra-graph edges; edge_index = [source_row, target_row] (PyG layout).
    src = jnp.repeat(jnp.arange(num_nodes, dtype=jnp.int32), out_degree)
    dst_local = jax.random.randint(
        k_edge, (num_nodes * out_degree,), 0, nodes_per_graph, jnp.int32)
    dst = (src // nodes_per_graph) * nodes_per_graph + dst_local
    edge_index = jnp.stack([src, dst])

    params = init_params(k_par, num_classes)

    out, pred, critical = gcn_forward(params, nrm, pos, batch, edge_index,
                                      n_graphs=n_graphs)
    out = jax.block_until_ready(out)
    pred = jax.block_until_ready(pred)
    critical = jax.block_until_ready(critical)

    assert out.shape == (n_graphs, num_classes)
    assert pred.shape == (n_graphs, num_classes)
    assert critical.shape == (n_graphs, 256)
    assert bool(jnp.all(jnp.isfinite(out)))
    assert bool(jnp.allclose(jnp.sum(jnp.exp(out), axis=1), 1.0, atol=1e-3))
    assert bool(jnp.allclose(pred, jnp.exp(out), atol=1e-4))
    lo = (jnp.arange(n_graphs, dtype=jnp.int32) * nodes_per_graph)[:, None]
    assert bool(jnp.all((critical >= lo) & (critical < lo + nodes_per_graph)))
    print("KERNEL_OK")
</pallas_src>

<mosaic_0001>
module attributes {stable_mosaic.version = 11 : i64} {
  func.func @_gcn_fused_kernel(%arg0: i32, %arg1: memref<1x32x32xbf16, #tpu.memory_space<vmem>>, %arg2: memref<1x32x128xbf16, #tpu.memory_space<vmem>>, %arg3: memref<128x128xbf16, #tpu.memory_space<vmem>>, %arg4: memref<1x128xf32, #tpu.memory_space<vmem>>, %arg5: memref<128x128xbf16, #tpu.memory_space<vmem>>, %arg6: memref<128x128xbf16, #tpu.memory_space<vmem>>, %arg7: memref<1x128xf32, #tpu.memory_space<vmem>>, %arg8: memref<128x256xbf16, #tpu.memory_space<vmem>>, %arg9: memref<128x256xbf16, #tpu.memory_space<vmem>>, %arg10: memref<1x256xf32, #tpu.memory_space<vmem>>, %arg11: memref<256x128xf32, #tpu.memory_space<vmem>>, %arg12: memref<1x128xf32, #tpu.memory_space<vmem>>, %arg13: memref<1x128xf32, #tpu.memory_space<vmem>>, %arg14: memref<1x8x128xf32, #tpu.memory_space<vmem>>, %arg15: memref<1x8x128xf32, #tpu.memory_space<vmem>>, %arg16: memref<1x8x256xi32, #tpu.memory_space<vmem>>) attributes {dimension_semantics = [#tpu.dimension_semantics<parallel>], iteration_bounds = array<i64: 2>, scalar_prefetch = 0 : i64, scratch_operands = 0 : i64, tpu.core_type = #tpu.core_type<tc>, window_params = [{transform_indices = @transform_0, window_bounds = array<i64: 1, 32, 32>}, {transform_indices = @transform_1, window_bounds = array<i64: 1, 32, 128>}, {pipeline_mode = #tpu.pipeline_mode<synchronous>, transform_indices = @transform_2, window_bounds = array<i64: 128, 128>}, {pipeline_mode = #tpu.pipeline_mode<synchronous>, transform_indices = @transform_3, window_bounds = array<i64: 1, 128>}, {pipeline_mode = #tpu.pipeline_mode<synchronous>, transform_indices = @transform_4, window_bounds = array<i64: 128, 128>}, {pipeline_mode = #tpu.pipeline_mode<synchronous>, transform_indices = @transform_5, window_bounds = array<i64: 128, 128>}, {pipeline_mode = #tpu.pipeline_mode<synchronous>, transform_indices = @transform_6, window_bounds = array<i64: 1, 128>}, {pipeline_mode = #tpu.pipeline_mode<synchronous>, transform_indices = @transform_7, window_bounds = array<i64: 128, 256>}, {pipeline_mode = #tpu.pipeline_mode<synchronous>, transform_indices = @transform_8, window_bounds = array<i64: 128, 256>}, {pipeline_mode = #tpu.pipeline_mode<synchronous>, transform_indices = @transform_9, window_bounds = array<i64: 1, 256>}, {pipeline_mode = #tpu.pipeline_mode<synchronous>, transform_indices = @transform_10, window_bounds = array<i64: 256, 128>}, {pipeline_mode = #tpu.pipeline_mode<synchronous>, transform_indices = @transform_11, window_bounds = array<i64: 1, 128>}, {pipeline_mode = #tpu.pipeline_mode<synchronous>, transform_indices = @transform_12, window_bounds = array<i64: 1, 128>}, {transform_indices = @transform_13, window_bounds = array<i64: 1, 8, 128>}, {transform_indices = @transform_14, window_bounds = array<i64: 1, 8, 128>}, {transform_indices = @transform_15, window_bounds = array<i64: 1, 8, 256>}]} {
    %c0 = arith.constant 0 : index
    %c0_0 = arith.constant 0 : index
    %c0_1 = arith.constant 0 : index
    %0 = vector.load %arg1[%c0, %c0_0, %c0_1] : memref<1x32x32xbf16, #tpu.memory_space<vmem>>, vector<1x32x32xbf16>
    %1 = vector.shape_cast %0 : vector<1x32x32xbf16> to vector<32x32xbf16>
    %c0_2 = arith.constant 0 : index
    %c0_3 = arith.constant 0 : index
    %c0_4 = arith.constant 0 : index
    %2 = vector.load %arg2[%c0_2, %c0_3, %c0_4] : memref<1x32x128xbf16, #tpu.memory_space<vmem>>, vector<1x32x128xbf16>
    %3 = vector.shape_cast %2 : vector<1x32x128xbf16> to vector<32x128xbf16>
    %c0_5 = arith.constant 0 : index
    %c0_6 = arith.constant 0 : index
    %4 = vector.load %arg3[%c0_5, %c0_6] : memref<128x128xbf16, #tpu.memory_space<vmem>>, vector<128x128xbf16>
    %cst = arith.constant dense<0.000000e+00> : vector<32x128xf32>
    %5 = tpu.matmul %3, %4, %cst {dimension_numbers = #tpu.dot_dimension_numbers<[1], [0], [0], [1], [0, 0, 1, 1], [], []>} : vector<32x128xbf16>, vector<128x128xbf16>, vector<32x128xf32> -> vector<32x128xf32>
    %6 = arith.truncf %5 : vector<32x128xf32> to vector<32x128xbf16>
    %cst_7 = arith.constant dense<0.000000e+00> : vector<32x128xf32>
    %7 = tpu.matmul %1, %6, %cst_7 {dimension_numbers = #tpu.dot_dimension_numbers<[1], [0], [0], [1], [0, 0, 1, 1], [], []>} : vector<32x32xbf16>, vector<32x128xbf16>, vector<32x128xf32> -> vector<32x128xf32>
    %c0_8 = arith.constant 0 : index
    %c0_9 = arith.constant 0 : index
    %8 = vector.load %arg4[%c0_8, %c0_9] : memref<1x128xf32, #tpu.memory_space<vmem>>, vector<1x128xf32>
    %9 = vector.broadcast %8 : vector<1x128xf32> to vector<32x128xf32>
    %10 = arith.addf %7, %9 : vector<32x128xf32>
    %cst_10 = arith.constant 0.000000e+00 : f32
    %11 = vector.broadcast %cst_10 : f32 to vector<32x128xf32>
    %12 = arith.maximumf %10, %11 : vector<32x128xf32>
    %13 = arith.truncf %12 : vector<32x128xf32> to vector<32x128xbf16>
    %c0_11 = arith.constant 0 : index
    %c0_12 = arith.constant 0 : index
    %14 = vector.load %arg5[%c0_11, %c0_12] : memref<128x128xbf16, #tpu.memory_space<vmem>>, vector<128x128xbf16>
    %cst_13 = arith.constant dense<0.000000e+00> : vector<32x128xf32>
    %15 = tpu.matmul %13, %14, %cst_13 {dimension_numbers = #tpu.dot_dimension_numbers<[1], [0], [0], [1], [0, 0, 1, 1], [], []>} : vector<32x128xbf16>, vector<128x128xbf16>, vector<32x128xf32> -> vector<32x128xf32>
    %c0_14 = arith.constant 0 : index
    %c0_15 = arith.constant 0 : index
    %16 = vector.load %arg6[%c0_14, %c0_15] : memref<128x128xbf16, #tpu.memory_space<vmem>>, vector<128x128xbf16>
    %cst_16 = arith.constant dense<0.000000e+00> : vector<32x128xf32>
    %17 = tpu.matmul %3, %16, %cst_16 {dimension_numbers = #tpu.dot_dimension_numbers<[1], [0], [0], [1], [0, 0, 1, 1], [], []>} : vector<32x128xbf16>, vector<128x128xbf16>, vector<32x128xf32> -> vector<32x128xf32>
    %18 = arith.addf %15, %17 : vector<32x128xf32>
    %19 = arith.truncf %18 : vector<32x128xf32> to vector<32x128xbf16>
    %cst_17 = arith.constant dense<0.000000e+00> : vector<32x128xf32>
    %20 = tpu.matmul %1, %19, %cst_17 {dimension_numbers = #tpu.dot_dimension_numbers<[1], [0], [0], [1], [0, 0, 1, 1], [], []>} : vector<32x32xbf16>, vector<32x128xbf16>, vector<32x128xf32> -> vector<32x128xf32>
    %c0_18 = arith.constant 0 : index
    %c0_19 = arith.constant 0 : index
    %21 = vector.load %arg7[%c0_18, %c0_19] : memref<1x128xf32, #tpu.memory_space<vmem>>, vector<1x128xf32>
    %22 = vector.broadcast %21 : vector<1x128xf32> to vector<32x128xf32>
    %23 = arith.addf %20, %22 : vector<32x128xf32>
    %cst_20 = arith.constant 0.000000e+00 : f32
    %24 = vector.broadcast %cst_20 : f32 to vector<32x128xf32>
    %25 = arith.maximumf %23, %24 : vector<32x128xf32>
    %26 = arith.truncf %25 : vector<32x128xf32> to vector<32x128xbf16>
    %c0_21 = arith.constant 0 : index
    %c0_22 = arith.constant 0 : index
    %27 = vector.load %arg8[%c0_21, %c0_22] : memref<128x256xbf16, #tpu.memory_space<vmem>>, vector<128x256xbf16>
    %cst_23 = arith.constant dense<0.000000e+00> : vector<32x256xf32>
    %28 = tpu.matmul %26, %27, %cst_23 {dimension_numbers = #tpu.dot_dimension_numbers<[1], [0], [0], [1], [0, 0, 1, 1], [], []>} : vector<32x128xbf16>, vector<128x256xbf16>, vector<32x256xf32> -> vector<32x256xf32>
    %c0_24 = arith.constant 0 : index
    %c0_25 = arith.constant 0 : index
    %29 = vector.load %arg9[%c0_24, %c0_25] : memref<128x256xbf16, #tpu.memory_space<vmem>>, vector<128x256xbf16>
    %cst_26 = arith.constant dense<0.000000e+00> : vector<32x256xf32>
    %30 = tpu.matmul %3, %29, %cst_26 {dimension_numbers = #tpu.dot_dimension_numbers<[1], [0], [0], [1], [0, 0, 1, 1], [], []>} : vector<32x128xbf16>, vector<128x256xbf16>, vector<32x256xf32> -> vector<32x256xf32>
    %31 = arith.addf %28, %30 : vector<32x256xf32>
    %32 = arith.truncf %31 : vector<32x256xf32> to vector<32x256xbf16>
    %cst_27 = arith.constant dense<0.000000e+00> : vector<32x256xf32>
    %33 = tpu.matmul %1, %32, %cst_27 {dimension_numbers = #tpu.dot_dimension_numbers<[1], [0], [0], [1], [0, 0, 1, 1], [], []>} : vector<32x32xbf16>, vector<32x256xbf16>, vector<32x256xf32> -> vector<32x256xf32>
    %c0_28 = arith.constant 0 : index
    %c0_29 = arith.constant 0 : index
    %34 = vector.load %arg10[%c0_28, %c0_29] : memref<1x256xf32, #tpu.memory_space<vmem>>, vector<1x256xf32>
    %35 = vector.broadcast %34 : vector<1x256xf32> to vector<32x256xf32>
    %36 = arith.addf %33, %35 : vector<32x256xf32>
    %cst_30 = arith.constant 0.000000e+00 : f32
    %37 = vector.broadcast %cst_30 : f32 to vector<32x256xf32>
    %38 = arith.maximumf %36, %37 : vector<32x256xf32>
    %cst_31 = arith.constant dense<0xFF800000> : vector<256xf32>
    %39 = vector.multi_reduction <maximumf>, %38, %cst_31 [0] : vector<32x256xf32> to vector<256xf32>
    %40 = vector.shape_cast %39 : vector<256xf32> to vector<1x256xf32>
    %41 = tpu.iota {dimensions = array<i32: 0>} : vector<32x256xi32>
    %42 = vector.broadcast %40 : vector<1x256xf32> to vector<32x256xf32>
    %43 = arith.cmpf oge, %38, %42 : vector<32x256xf32>
    %c1073741824_i32 = arith.constant 1073741824 : i32
    %44 = vector.broadcast %c1073741824_i32 : i32 to vector<32x256xi32>
    %45 = arith.select %43, %41, %44 : vector<32x256xi1>, vector<32x256xi32>
    %cst_32 = arith.constant dense<2147483647> : vector<256xi32>
    %46 = vector.multi_reduction <minsi>, %45, %cst_32 [0] : vector<32x256xi32> to vector<256xi32>
    %47 = vector.shape_cast %46 : vector<256xi32> to vector<1x256xi32>
    %c32_i32 = arith.constant 32 : i32
    %48 = arith.muli %arg0, %c32_i32 : i32
    %49 = vector.broadcast %48 : i32 to vector<1x256xi32>
    %50 = arith.addi %47, %49 : vector<1x256xi32>
    %51 = vector.shape_cast %40 : vector<1x256xf32> to vector<1x256xf32>
    %52 = vector.broadcast %51 : vector<1x256xf32> to vector<8x256xf32>
    %c0_33 = arith.constant 0 : index
    %c0_34 = arith.constant 0 : index
    %53 = vector.load %arg11[%c0_33, %c0_34] : memref<256x128xf32, #tpu.memory_space<vmem>>, vector<256x128xf32>
    %cst_35 = arith.constant dense<0.000000e+00> : vector<8x128xf32>
    %54 = tpu.matmul %52, %53, %cst_35 {dimension_numbers = #tpu.dot_dimension_numbers<[1], [0], [0], [1], [0, 0, 1, 1], [], []>} : vector<8x256xf32>, vector<256x128xf32>, vector<8x128xf32> -> vector<8x128xf32>
    %c0_36 = arith.constant 0 : index
    %c0_37 = arith.constant 0 : index
    %55 = vector.load %arg12[%c0_36, %c0_37] : memref<1x128xf32, #tpu.memory_space<vmem>>, vector<1x128xf32>
    %56 = vector.broadcast %55 : vector<1x128xf32> to vector<8x128xf32>
    %57 = arith.addf %54, %56 : vector<8x128xf32>
    %c0_38 = arith.constant 0 : index
    %c0_39 = arith.constant 0 : index
    %58 = vector.load %arg13[%c0_38, %c0_39] : memref<1x128xf32, #tpu.memory_space<vmem>>, vector<1x128xf32>
    %cst_40 = arith.constant 0.000000e+00 : f32
    %59 = vector.broadcast %cst_40 : f32 to vector<1x128xf32>
    %60 = arith.cmpf ogt, %58, %59 : vector<1x128xf32>
    %cst_41 = arith.constant -1.000000e+30 : f32
    %61 = vector.shape_cast %60 : vector<1x128xi1> to vector<1x128xi1>
    %62 = vector.broadcast %61 : vector<1x128xi1> to vector<8x128xi1>
    %63 = vector.broadcast %cst_41 : f32 to vector<8x128xf32>
    %64 = arith.select %62, %57, %63 : vector<8x128xi1>, vector<8x128xf32>
    %cst_42 = arith.constant dense<0xFF800000> : vector<8xf32>
    %65 = vector.multi_reduction <maximumf>, %64, %cst_42 [1] : vector<8x128xf32> to vector<8xf32>
    %66 = vector.shape_cast %65 : vector<8xf32> to vector<8x1xf32>
    %67 = vector.broadcast %66 : vector<8x1xf32> to vector<8x128xf32>
    %68 = arith.subf %57, %67 : vector<8x128xf32>
    %69 = math.exp %68 : vector<8x128xf32>
    %cst_43 = arith.constant 0.000000e+00 : f32
    %70 = vector.shape_cast %60 : vector<1x128xi1> to vector<1x128xi1>
    %71 = vector.broadcast %70 : vector<1x128xi1> to vector<8x128xi1>
    %72 = vector.broadcast %cst_43 : f32 to vector<8x128xf32>
    %73 = arith.select %71, %69, %72 : vector<8x128xi1>, vector<8x128xf32>
    %cst_44 = arith.constant dense<0.000000e+00> : vector<8xf32>
    %74 = vector.multi_reduction <add>, %73, %cst_44 [1] : vector<8x128xf32> to vector<8xf32>
    %75 = vector.shape_cast %74 : vector<8xf32> to vector<8x1xf32>
    %76 = math.log %75 : vector<8x1xf32>
    %77 = vector.broadcast %76 : vector<8x1xf32> to vector<8x128xf32>
    %78 = arith.subf %68, %77 : vector<8x128xf32>
    %c0_45 = arith.constant 0 : index
    %c0_46 = arith.constant 0 : index
    %c0_47 = arith.constant 0 : index
    %79 = vector.load %arg14[%c0_45, %c0_46, %c0_47] : memref<1x8x128xf32, #tpu.memory_space<vmem>>, vector<1x8x128xf32>
    %80 = vector.shape_cast %79 : vector<1x8x128xf32> to vector<8x128xf32>
    %81 = vector.shape_cast %78 : vector<8x128xf32> to vector<1x8x128xf32>
    tpu.vector_store %arg14[%c0_45, %c0_46, %c0_47], %81 {strides = array<i32>} : memref<1x8x128xf32, #tpu.memory_space<vmem>>, vector<1x8x128xf32>,
    %82 = math.exp %78 : vector<8x128xf32>
    %cst_48 = arith.constant 0.000000e+00 : f32
    %83 = vector.shape_cast %60 : vector<1x128xi1> to vector<1x128xi1>
    %84 = vector.broadcast %83 : vector<1x128xi1> to vector<8x128xi1>
    %85 = vector.broadcast %cst_48 : f32 to vector<8x128xf32>
    %86 = arith.select %84, %82, %85 : vector<8x128xi1>, vector<8x128xf32>
    %c0_49 = arith.constant 0 : index
    %c0_50 = arith.constant 0 : index
    %c0_51 = arith.constant 0 : index
    %87 = vector.load %arg15[%c0_49, %c0_50, %c0_51] : memref<1x8x128xf32, #tpu.memory_space<vmem>>, vector<1x8x128xf32>
    %88 = vector.shape_cast %87 : vector<1x8x128xf32> to vector<8x128xf32>
    %89 = vector.shape_cast %86 : vector<8x128xf32> to vector<1x8x128xf32>
    tpu.vector_store %arg15[%c0_49, %c0_50, %c0_51], %89 {strides = array<i32>} : memref<1x8x128xf32, #tpu.memory_space<vmem>>, vector<1x8x128xf32>,
    %90 = vector.shape_cast %50 : vector<1x256xi32> to vector<1x256xi32>
    %91 = vector.broadcast %90 : vector<1x256xi32> to vector<8x256xi32>
    %c0_52 = arith.constant 0 : index
    %c0_53 = arith.constant 0 : index
    %c0_54 = arith.constant 0 : index
    %92 = vector.load %arg16[%c0_52, %c0_53, %c0_54] : memref<1x8x256xi32, #tpu.memory_space<vmem>>, vector<1x8x256xi32>
    %93 = vector.shape_cast %92 : vector<1x8x256xi32> to vector<8x256xi32>
    %94 = vector.shape_cast %91 : vector<8x256xi32> to vector<1x8x256xi32>
    tpu.vector_store %arg16[%c0_52, %c0_53, %c0_54], %94 {strides = array<i32>} : memref<1x8x256xi32, #tpu.memory_space<vmem>>, vector<1x8x256xi32>,
    return
  }
  func.func @transform_0(%arg0: i32) -> (i32, i32, i32) {
    %c0_i32 = arith.constant 0 : i32
    %c0_i32_0 = arith.constant 0 : i32
    %c0_i32_1 = arith.constant 0 : i32
    return %arg0, %c0_i32, %c0_i32_0 : i32, i32, i32
  }
  func.func @transform_1(%arg0: i32) -> (i32, i32, i32) {
    %c0_i32 = arith.constant 0 : i32
    %c0_i32_0 = arith.constant 0 : i32
    %c0_i32_1 = arith.constant 0 : i32
    return %arg0, %c0_i32, %c0_i32_0 : i32, i32, i32
  }
  func.func @transform_2(%arg0: i32) -> (i32, i32) {
    %c0_i32 = arith.constant 0 : i32
    %c0_i32_0 = arith.constant 0 : i32
    %c0_i32_1 = arith.constant 0 : i32
    return %c0_i32, %c0_i32_0 : i32, i32
  }
  func.func @transform_3(%arg0: i32) -> (i32, i32) {
    %c0_i32 = arith.constant 0 : i32
    %c0_i32_0 = arith.constant 0 : i32
    %c0_i32_1 = arith.constant 0 : i32
    return %c0_i32, %c0_i32_0 : i32, i32
  }
  func.func @transform_4(%arg0: i32) -> (i32, i32) {
    %c0_i32 = arith.constant 0 : i32
    %c0_i32_0 = arith.constant 0 : i32
    %c0_i32_1 = arith.constant 0 : i32
    return %c0_i32, %c0_i32_0 : i32, i32
  }
  func.func @transform_5(%arg0: i32) -> (i32, i32) {
    %c0_i32 = arith.constant 0 : i32
    %c0_i32_0 = arith.constant 0 : i32
    %c0_i32_1 = arith.constant 0 : i32
    return %c0_i32, %c0_i32_0 : i32, i32
  }
  func.func @transform_6(%arg0: i32) -> (i32, i32) {
    %c0_i32 = arith.constant 0 : i32
    %c0_i32_0 = arith.constant 0 : i32
    %c0_i32_1 = arith.constant 0 : i32
    return %c0_i32, %c0_i32_0 : i32, i32
  }
  func.func @transform_7(%arg0: i32) -> (i32, i32) {
    %c0_i32 = arith.constant 0 : i32
    %c0_i32_0 = arith.constant 0 : i32
    %c0_i32_1 = arith.constant 0 : i32
    return %c0_i32, %c0_i32_0 : i32, i32
  }
  func.func @transform_8(%arg0: i32) -> (i32, i32) {
    %c0_i32 = arith.constant 0 : i32
    %c0_i32_0 = arith.constant 0 : i32
    %c0_i32_1 = arith.constant 0 : i32
    return %c0_i32, %c0_i32_0 : i32, i32
  }
  func.func @transform_9(%arg0: i32) -> (i32, i32) {
    %c0_i32 = arith.constant 0 : i32
    %c0_i32_0 = arith.constant 0 : i32
    %c0_i32_1 = arith.constant 0 : i32
    return %c0_i32, %c0_i32_0 : i32, i32
  }
  func.func @transform_10(%arg0: i32) -> (i32, i32) {
    %c0_i32 = arith.constant 0 : i32
    %c0_i32_0 = arith.constant 0 : i32
    %c0_i32_1 = arith.constant 0 : i32
    return %c0_i32, %c0_i32_0 : i32, i32
  }
  func.func @transform_11(%arg0: i32) -> (i32, i32) {
    %c0_i32 = arith.constant 0 : i32
    %c0_i32_0 = arith.constant 0 : i32
    %c0_i32_1 = arith.constant 0 : i32
    return %c0_i32, %c0_i32_0 : i32, i32
  }
  func.func @transform_12(%arg0: i32) -> (i32, i32) {
    %c0_i32 = arith.constant 0 : i32
    %c0_i32_0 = arith.constant 0 : i32
    %c0_i32_1 = arith.constant 0 : i32
    return %c0_i32, %c0_i32_0 : i32, i32
  }
  func.func @transform_13(%arg0: i32) -> (i32, i32, i32) {
    %c0_i32 = arith.constant 0 : i32
    %c0_i32_0 = arith.constant 0 : i32
    %c0_i32_1 = arith.constant 0 : i32
    return %arg0, %c0_i32, %c0_i32_0 : i32, i32, i32
  }
  func.func @transform_14(%arg0: i32) -> (i32, i32, i32) {
    %c0_i32 = arith.constant 0 : i32
    %c0_i32_0 = arith.constant 0 : i32
    %c0_i32_1 = arith.constant 0 : i32
    return %arg0, %c0_i32, %c0_i32_0 : i32, i32, i32
  }
  func.func @transform_15(%arg0: i32) -> (i32, i32, i32) {
    %c0_i32 = arith.constant 0 : i32
    %c0_i32_0 = arith.constant 0 : i32
    %c0_i32_1 = arith.constant 0 : i32
    return %arg0, %c0_i32, %c0_i32_0 : i32, i32, i32
  }
}

</mosaic_0001>

<llo_original>
// kernel: _gcn_forward_impl.1
$region0: #{_gcn_forward_impl.1}
  #allocation0 [shape = 'u32[]', space=smem, size = 0x4, offset = 0x4, fixed_abs, tag = 'smem constant byte address 0x4 - core index']
  #allocation1 [shape = 'u32[72,128]{1,0:T(1,128)}', space=vmem, size = 0x9000, scoped, tag = 'internal scratch']
  %s0 = inlined_call_operand.vmem [shape: bf16[2,32,32], index: 0, kind: input, shape index: {}]
  %s1 = inlined_call_operand.vmem [shape: bf16[2,32,128], index: 1, kind: input, shape index: {}]
  %s2 = inlined_call_operand.vmem [shape: bf16[128,128], index: 2, kind: input, shape index: {}]
  %s3 = inlined_call_operand.vmem [shape: f32[1,128], index: 3, kind: input, shape index: {}]
  %s4 = inlined_call_operand.vmem [shape: bf16[128,128], index: 4, kind: input, shape index: {}]
  %s5 = inlined_call_operand.vmem [shape: bf16[128,128], index: 5, kind: input, shape index: {}]
  %s6 = inlined_call_operand.vmem [shape: f32[1,128], index: 6, kind: input, shape index: {}]
  %s7 = inlined_call_operand.vmem [shape: bf16[128,256], index: 7, kind: input, shape index: {}]
  %s8 = inlined_call_operand.vmem [shape: bf16[128,256], index: 8, kind: input, shape index: {}]
  %s9 = inlined_call_operand.vmem [shape: f32[1,256], index: 9, kind: input, shape index: {}]
  %s10 = inlined_call_operand.vmem [shape: f32[256,128], index: 10, kind: input, shape index: {}]
  %s11 = inlined_call_operand.vmem [shape: f32[1,128], index: 11, kind: input, shape index: {}]
  %s12 = inlined_call_operand.vmem [shape: f32[1,128], index: 12, kind: input, shape index: {}]
  %s13 = inlined_call_operand.vmem [shape: f32[2,8,128], index: 13, kind: output, shape index: {0}]
  %s14 = inlined_call_operand.vmem [shape: f32[2,8,128], index: 14, kind: output, shape index: {1}]
  %s15 = inlined_call_operand.vmem [shape: s32[2,8,256], index: 15, kind: output, shape index: {2}]
  %16 = xla_tuple %s13, %s14, %s15
  %s17 = sld [smem:[#allocation0]]
  $region101: #{_gcn_forward_impl.1} parent=0
    _
  %s19 = ssub.s32 1, %s17
  %s20 = scalar_select 0, %s19, %s17
  loop: start=0, step=1, limit=4
  $region2: #{_gcn_forward_impl.1} parent=0 // loop_pre_header
    _
  $region3: #{_gcn_forward_impl.1} parent=0 // loop_header
    %s22 = sphi 0, %s26
    %p23 = scmp.ge.s32.totalorder %s22, 4
    %s32 = sphi 0, %s34
    %s35 = sphi 0, %s32
    %s36 = sphi 0, %s35
    %s52 = sphi 0, %s36
    %s58 = sphi 0, %s60
    %s61 = sphi 0, %s58
    %s62 = sphi 0, %s61
    %s78 = sphi 0, %s62
    %s82 = sphi 0, %s82
    %s84 = sphi 0, %s82
    %s85 = sphi 0, %s84
    %s99 = sphi 0, %s85
    %s103 = sphi 0, %s103
    %s105 = sphi 0, %s103
    %s106 = sphi 0, %s105
    %s120 = sphi 0, %s106
    %s124 = sphi 0, %s124
    %s126 = sphi 0, %s124
    %s127 = sphi 0, %s126
    %s141 = sphi 0, %s127
    %s145 = sphi 0, %s145
    %s147 = sphi 0, %s145
    %s148 = sphi 0, %s147
    %s162 = sphi 0, %s148
    %s166 = sphi 0, %s166
    %s168 = sphi 0, %s166
    %s169 = sphi 0, %s168
    %s183 = sphi 0, %s169
    %s187 = sphi 0, %s187
    %s189 = sphi 0, %s187
    %s190 = sphi 0, %s189
    %s204 = sphi 0, %s190
    %s208 = sphi 0, %s208
    %s210 = sphi 0, %s208
    %s211 = sphi 0, %s210
    %s225 = sphi 0, %s211
    %s229 = sphi 0, %s229
    %s231 = sphi 0, %s229
    %s232 = sphi 0, %s231
    %s246 = sphi 0, %s232
    %s250 = sphi 0, %s250
    %s252 = sphi 0, %s250
    %s253 = sphi 0, %s252
    %s267 = sphi 0, %s253
    %s271 = sphi 0, %s271
    %s273 = sphi 0, %s271
    %s274 = sphi 0, %s273
    %s288 = sphi 0, %s274
    %s292 = sphi 0, %s292
    %s294 = sphi 0, %s292
    %s295 = sphi 0, %s294
    %s309 = sphi 0, %s295
    %s315 = sphi 0, %s317
    %s318 = sphi 0, %s315
    %s319 = sphi 0, %s318
    %s335 = sphi 0, %s319
    %s341 = sphi 0, %s343
    %s344 = sphi 0, %s341
    %s345 = sphi 0, %s344
    %s361 = sphi 0, %s345
    %s367 = sphi 0, %s369
    %s370 = sphi 0, %s367
    %s371 = sphi 0, %s370
    %s387 = sphi 0, %s371
  $region4: #{_gcn_forward_impl.1} parent=0 // loop_header_branch
    %25 = sbr.rel (%p23) target = $region8
  $region5: #{_gcn_forward_impl.1} parent=0 // loop_body
    %s27 = ssub.s32 %s22, 1
    %s28 = ssub.s32 %s22, 2
    %s29 = sadd.s32 %s22, 1
    %s30 = ssub.s32 %s22, %s29
    %p31 = scmp.eq.s32.totalorder %s30, 0
    %s33 = sadd.s32 %s32, 1
    %s34 = scalar_select %p31, %s32, %s33
    %p37 = pneg %p31
    %p38 = scmp.eq.s32.totalorder %s22, 1
    %p39 = por %p37, %p38
    %p40 = scmp.ne.s32.totalorder %s32, %s35
    %p41 = scmp.eq.s32.totalorder %s22, 0
    %p42 = por %p40, %p41
    %p43 = scmp.ne.s32.totalorder %s32, %s35
    %p44 = scmp.eq.s32.totalorder %s27, 1
    %p45 = por %p43, %p44
    %p46 = scmp.ne.s32.totalorder %s35, %s36
    %p47 = scmp.eq.s32.totalorder %s27, 0
    %p48 = por %p46, %p47
    %p49 = scmp.ne.s32.totalorder %s35, %s36
    %p50 = scmp.eq.s32.totalorder %s28, 1
    %p51 = por %p49, %p50
    %p53 = scmp.ne.s32.totalorder %s36, %s52
    %p54 = scmp.eq.s32.totalorder %s28, 0
    %p55 = por %p53, %p54
    %s56 = ssub.s32 %s22, %s29
    %p57 = scmp.eq.s32.totalorder %s56, 0
    %s59 = sadd.s32 %s58, 1
    %s60 = scalar_select %p57, %s58, %s59
    %p63 = pneg %p57
    %p64 = scmp.eq.s32.totalorder %s22, 1
    %p65 = por %p63, %p64
    %p66 = scmp.ne.s32.totalorder %s58, %s61
    %p67 = scmp.eq.s32.totalorder %s22, 0
    %p68 = por %p66, %p67
    %p69 = scmp.ne.s32.totalorder %s58, %s61
    %p70 = scmp.eq.s32.totalorder %s27, 1
    %p71 = por %p69, %p70
    %p72 = scmp.ne.s32.totalorder %s61, %s62
    %p73 = scmp.eq.s32.totalorder %s27, 0
    %p74 = por %p72, %p73
    %p75 = scmp.ne.s32.totalorder %s61, %s62
    %p76 = scmp.eq.s32.totalorder %s28, 1
    %p77 = por %p75, %p76
    %p79 = scmp.ne.s32.totalorder %s62, %s78
    %p80 = scmp.eq.s32.totalorder %s28, 0
    %p81 = por %p79, %p80
    %s83 = sadd.s32 %s82, 1
    %p86 = scmp.eq.s32.totalorder %s22, 1
    %p87 = scmp.ne.s32.totalorder %s82, %s84
    %p88 = scmp.eq.s32.totalorder %s22, 0
    %p89 = por %p87, %p88
    %p90 = scmp.ne.s32.totalorder %s82, %s84
    %p91 = scmp.eq.s32.totalorder %s27, 1
    %p92 = por %p90, %p91
    %p93 = scmp.ne.s32.totalorder %s84, %s85
    %p94 = scmp.eq.s32.totalorder %s27, 0
    %p95 = por %p93, %p94
    %p96 = scmp.ne.s32.totalorder %s84, %s85
    %p97 = scmp.eq.s32.totalorder %s28, 1
    %p98 = por %p96, %p97
    %p100 = scmp.ne.s32.totalorder %s85, %s99
    %p101 = scmp.eq.s32.totalorder %s28, 0
    %p102 = por %p100, %p101
    %s104 = sadd.s32 %s103, 1
    %p107 = scmp.eq.s32.totalorder %s22, 1
    %p108 = scmp.ne.s32.totalorder %s103, %s105
    %p109 = scmp.eq.s32.totalorder %s22, 0
    %p110 = por %p108, %p109
    %p111 = scmp.ne.s32.totalorder %s103, %s105
    %p112 = scmp.eq.s32.totalorder %s27, 1
    %p113 = por %p111, %p112
    %p114 = scmp.ne.s32.totalorder %s105, %s106
    %p115 = scmp.eq.s32.totalorder %s27, 0
    %p116 = por %p114, %p115
    %p117 = scmp.ne.s32.totalorder %s105, %s106
    %p118 = scmp.eq.s32.totalorder %s28, 1
    %p119 = por %p117, %p118
    %p121 = scmp.ne.s32.totalorder %s106, %s120
    %p122 = scmp.eq.s32.totalorder %s28, 0
    %p123 = por %p121, %p122
    %s125 = sadd.s32 %s124, 1
    %p128 = scmp.eq.s32.totalorder %s22, 1
    %p129 = scmp.ne.s32.totalorder %s124, %s126
    %p130 = scmp.eq.s32.totalorder %s22, 0
    %p131 = por %p129, %p130
    %p132 = scmp.ne.s32.totalorder %s124, %s126
    %p133 = scmp.eq.s32.totalorder %s27, 1
    %p134 = por %p132, %p133
    %p135 = scmp.ne.s32.totalorder %s126, %s127
    %p136 = scmp.eq.s32.totalorder %s27, 0
    %p137 = por %p135, %p136
    %p138 = scmp.ne.s32.totalorder %s126, %s127
    %p139 = scmp.eq.s32.totalorder %s28, 1
    %p140 = por %p138, %p139
    %p142 = scmp.ne.s32.totalorder %s127, %s141
    %p143 = scmp.eq.s32.totalorder %s28, 0
    %p144 = por %p142, %p143
    %s146 = sadd.s32 %s145, 1
    %p149 = scmp.eq.s32.totalorder %s22, 1
    %p150 = scmp.ne.s32.totalorder %s145, %s147
    %p151 = scmp.eq.s32.totalorder %s22, 0
    %p152 = por %p150, %p151
    %p153 = scmp.ne.s32.totalorder %s145, %s147
    %p154 = scmp.eq.s32.totalorder %s27, 1
    %p155 = por %p153, %p154
    %p156 = scmp.ne.s32.totalorder %s147, %s148
    %p157 = scmp.eq.s32.totalorder %s27, 0
    %p158 = por %p156, %p157
    %p159 = scmp.ne.s32.totalorder %s147, %s148
    %p160 = scmp.eq.s32.totalorder %s28, 1
    %p161 = por %p159, %p160
    %p163 = scmp.ne.s32.totalorder %s148, %s162
    %p164 = scmp.eq.s32.totalorder %s28, 0
    %p165 = por %p163, %p164
    %s167 = sadd.s32 %s166, 1
    %p170 = scmp.eq.s32.totalorder %s22, 1
    %p171 = scmp.ne.s32.totalorder %s166, %s168
    %p172 = scmp.eq.s32.totalorder %s22, 0
    %p173 = por %p171, %p172
    %p174 = scmp.ne.s32.totalorder %s166, %s168
    %p175 = scmp.eq.s32.totalorder %s27, 1
    %p176 = por %p174, %p175
    %p177 = scmp.ne.s32.totalorder %s168, %s169
    %p178 = scmp.eq.s32.totalorder %s27, 0
    %p179 = por %p177, %p178
    %p180 = scmp.ne.s32.totalorder %s168, %s169
    %p181 = scmp.eq.s32.totalorder %s28, 1
    %p182 = por %p180, %p181
    %p184 = scmp.ne.s32.totalorder %s169, %s183
    %p185 = scmp.eq.s32.totalorder %s28, 0
    %p186 = por %p184, %p185
    %s188 = sadd.s32 %s187, 1
    %p191 = scmp.eq.s32.totalorder %s22, 1
    %p192 = scmp.ne.s32.totalorder %s187, %s189
    %p193 = scmp.eq.s32.totalorder %s22, 0
    %p194 = por %p192, %p193
    %p195 = scmp.ne.s32.totalorder %s187, %s189
    %p196 = scmp.eq.s32.totalorder %s27, 1
    %p197 = por %p195, %p196
    %p198 = scmp.ne.s32.totalorder %s189, %s190
    %p199 = scmp.eq.s32.totalorder %s27, 0
    %p200 = por %p198, %p199
    %p201 = scmp.ne.s32.totalorder %s189, %s190
    %p202 = scmp.eq.s32.totalorder %s28, 1
    %p203 = por %p201, %p202
    %p205 = scmp.ne.s32.totalorder %s190, %s204
    %p206 = scmp.eq.s32.totalorder %s28, 0
    %p207 = por %p205, %p206
    %s209 = sadd.s32 %s208, 1
    %p212 = scmp.eq.s32.totalorder %s22, 1
    %p213 = scmp.ne.s32.totalorder %s208, %s210
    %p214 = scmp.eq.s32.totalorder %s22, 0
    %p215 = por %p213, %p214
    %p216 = scmp.ne.s32.totalorder %s208, %s210
    %p217 = scmp.eq.s32.totalorder %s27, 1
    %p218 = por %p216, %p217
    %p219 = scmp.ne.s32.totalorder %s210, %s211
    %p220 = scmp.eq.s32.totalorder %s27, 0
    %p221 = por %p219, %p220
    %p222 = scmp.ne.s32.totalorder %s210, %s211
    %p223 = scmp.eq.s32.totalorder %s28, 1
    %p224 = por %p222, %p223
    %p226 = scmp.ne.s32.totalorder %s211, %s225
    %p227 = scmp.eq.s32.totalorder %s28, 0
    %p228 = por %p226, %p227
    %s230 = sadd.s32 %s229, 1
    %p233 = scmp.eq.s32.totalorder %s22, 1
    %p234 = scmp.ne.s32.totalorder %s229, %s231
    %p235 = scmp.eq.s32.totalorder %s22, 0
    %p236 = por %p234, %p235
    %p237 = scmp.ne.s32.totalorder %s229, %s231
    %p238 = scmp.eq.s32.totalorder %s27, 1
    %p239 = por %p237, %p238
    %p240 = scmp.ne.s32.totalorder %s231, %s232
    %p241 = scmp.eq.s32.totalorder %s27, 0
    %p242 = por %p240, %p241
    %p243 = scmp.ne.s32.totalorder %s231, %s232
    %p244 = scmp.eq.s32.totalorder %s28, 1
    %p245 = por %p243, %p244
    %p247 = scmp.ne.s32.totalorder %s232, %s246
    %p248 = scmp.eq.s32.totalorder %s28, 0
    %p249 = por %p247, %p248
    %s251 = sadd.s32 %s250, 1
    %p254 = scmp.eq.s32.totalorder %s22, 1
    %p255 = scmp.ne.s32.totalorder %s250, %s252
    %p256 = scmp.eq.s32.totalorder %s22, 0
    %p257 = por %p255, %p256
    %p258 = scmp.ne.s32.totalorder %s250, %s252
    %p259 = scmp.eq.s32.totalorder %s27, 1
    %p260 = por %p258, %p259
    %p261 = scmp.ne.s32.totalorder %s252, %s253
    %p262 = scmp.eq.s32.totalorder %s27, 0
    %p263 = por %p261, %p262
    %p264 = scmp.ne.s32.totalorder %s252, %s253
    %p265 = scmp.eq.s32.totalorder %s28, 1
    %p266 = por %p264, %p265
    %p268 = scmp.ne.s32.totalorder %s253, %s267
    %p269 = scmp.eq.s32.totalorder %s28, 0
    %p270 = por %p268, %p269
    %s272 = sadd.s32 %s271, 1
    %p275 = scmp.eq.s32.totalorder %s22, 1
    %p276 = scmp.ne.s32.totalorder %s271, %s273
    %p277 = scmp.eq.s32.totalorder %s22, 0
    %p278 = por %p276, %p277
    %p279 = scmp.ne.s32.totalorder %s271, %s273
    %p280 = scmp.eq.s32.totalorder %s27, 1
    %p281 = por %p279, %p280
    %p282 = scmp.ne.s32.totalorder %s273, %s274
    %p283 = scmp.eq.s32.totalorder %s27, 0
    %p284 = por %p282, %p283
    %p285 = scmp.ne.s32.totalorder %s273, %s274
    %p286 = scmp.eq.s32.totalorder %s28, 1
    %p287 = por %p285, %p286
    %p289 = scmp.ne.s32.totalorder %s274, %s288
    %p290 = scmp.eq.s32.totalorder %s28, 0
    %p291 = por %p289, %p290
    %s293 = sadd.s32 %s292, 1
    %p296 = scmp.eq.s32.totalorder %s22, 1
    %p297 = scmp.ne.s32.totalorder %s292, %s294
    %p298 = scmp.eq.s32.totalorder %s22, 0
    %p299 = por %p297, %p298
    %p300 = scmp.ne.s32.totalorder %s292, %s294
    %p301 = scmp.eq.s32.totalorder %s27, 1
    %p302 = por %p300, %p301
    %p303 = scmp.ne.s32.totalorder %s294, %s295
    %p304 = scmp.eq.s32.totalorder %s27, 0
    %p305 = por %p303, %p304
    %p306 = scmp.ne.s32.totalorder %s294, %s295
    %p307 = scmp.eq.s32.totalorder %s28, 1
    %p308 = por %p306, %p307
    %p310 = scmp.ne.s32.totalorder %s295, %s309
    %p311 = scmp.eq.s32.totalorder %s28, 0
    %p312 = por %p310, %p311
    %s313 = ssub.s32 %s22, %s29
    %p314 = scmp.eq.s32.totalorder %s313, 0
    %s316 = sadd.s32 %s315, 1
    %s317 = scalar_select %p314, %s315, %s316
    %p320 = pneg %p314
    %p321 = scmp.eq.s32.totalorder %s22, 1
    %p322 = por %p320, %p321
    %p323 = scmp.ne.s32.totalorder %s315, %s318
    %p324 = scmp.eq.s32.totalorder %s22, 0
    %p325 = por %p323, %p324
    %p326 = scmp.ne.s32.totalorder %s315, %s318
    %p327 = scmp.eq.s32.totalorder %s27, 1
    %p328 = por %p326, %p327
    %p329 = scmp.ne.s32.totalorder %s318, %s319
    %p330 = scmp.eq.s32.totalorder %s27, 0
    %p331 = por %p329, %p330
    %p332 = scmp.ne.s32.totalorder %s318, %s319
    %p333 = scmp.eq.s32.totalorder %s28, 1
    %p334 = por %p332, %p333
    %p336 = scmp.ne.s32.totalorder %s319, %s335
    %p337 = scmp.eq.s32.totalorder %s28, 0
    %p338 = por %p336, %p337
    %s339 = ssub.s32 %s22, %s29
    %p340 = scmp.eq.s32.totalorder %s339, 0
    %s342 = sadd.s32 %s341, 1
    %s343 = scalar_select %p340, %s341, %s342
    %p346 = pneg %p340
    %p347 = scmp.eq.s32.totalorder %s22, 1
    %p348 = por %p346, %p347
    %p349 = scmp.ne.s32.totalorder %s341, %s344
    %p350 = scmp.eq.s32.totalorder %s22, 0
    %p351 = por %p349, %p350
    %p352 = scmp.ne.s32.totalorder %s341, %s344
    %p353 = scmp.eq.s32.totalorder %s27, 1
    %p354 = por %p352, %p353
    %p355 = scmp.ne.s32.totalorder %s344, %s345
    %p356 = scmp.eq.s32.totalorder %s27, 0
    %p357 = por %p355, %p356
    %p358 = scmp.ne.s32.totalorder %s344, %s345
    %p359 = scmp.eq.s32.totalorder %s28, 1
    %p360 = por %p358, %p359
    %p362 = scmp.ne.s32.totalorder %s345, %s361
    %p363 = scmp.eq.s32.totalorder %s28, 0
    %p364 = por %p362, %p363
    %s365 = ssub.s32 %s22, %s29
    %p366 = scmp.eq.s32.totalorder %s365, 0
    %s368 = sadd.s32 %s367, 1
    %s369 = scalar_select %p366, %s367, %s368
    %p372 = pneg %p366
    %p373 = scmp.eq.s32.totalorder %s22, 1
    %p374 = por %p372, %p373
    %p375 = scmp.ne.s32.totalorder %s367, %s370
    %p376 = scmp.eq.s32.totalorder %s22, 0
    %p377 = por %p375, %p376
    %p378 = scmp.ne.s32.totalorder %s367, %s370
    %p379 = scmp.eq.s32.totalorder %s27, 1
    %p380 = por %p378, %p379
    %p381 = scmp.ne.s32.totalorder %s370, %s371
    %p382 = scmp.eq.s32.totalorder %s27, 0
    %p383 = por %p381, %p382
    %p384 = scmp.ne.s32.totalorder %s370, %s371
    %p385 = scmp.eq.s32.totalorder %s28, 1
    %p386 = por %p384, %p385
    %p388 = scmp.ne.s32.totalorder %s371, %s387
    %p389 = scmp.eq.s32.totalorder %s28, 0
    %p390 = por %p388, %p389
    %p391 = scmp.le.s32.totalorder 1, %s22
    %p392 = scmp.lt.s32.totalorder %s22, 3
    %p393 = pnand %p391, %p392
    %p394 = pneg %p393
    // Predicated region
    $region9: #{_gcn_forward_impl.1} parent=5 // pred_check
      _
    $region10: #{_gcn_forward_impl.1} parent=5 // pred_check_branch
      %396 = sbr.rel (%p393) target = $region12
    $region11: #{_gcn_forward_impl.1} parent=5 // pred_region
      %s397 = ssub.s32 %s22, 1
      // Predicated region
      $region13: #{_gcn_forward_impl.1} parent=11 // pred_check
        %p398 = pneg %p95
      $region14: #{_gcn_forward_impl.1} parent=11 // pred_check_branch
        %400 = sbr.rel (%p398) target = $region16
      $region15: #{_gcn_forward_impl.1} parent=11 // pred_region
        _
      $region16: #{_gcn_forward_impl.1} parent=11 // pred_fallthru
        _
      // Predicated region
      $region17: #{_gcn_forward_impl.1} parent=11 // pred_check
        %p401 = pneg %p116
      $region18: #{_gcn_forward_impl.1} parent=11 // pred_check_branch
        %403 = sbr.rel (%p401) target = $region20
      $region19: #{_gcn_forward_impl.1} parent=11 // pred_region
        _
      $region20: #{_gcn_forward_impl.1} parent=11 // pred_fallthru
        _
      // Predicated region
      $region21: #{_gcn_forward_impl.1} parent=11 // pred_check
        %p404 = pneg %p137
      $region22: #{_gcn_forward_impl.1} parent=11 // pred_check_branch
        %406 = sbr.rel (%p404) target = $region24
      $region23: #{_gcn_forward_impl.1} parent=11 // pred_region
        _
      $region24: #{_gcn_forward_impl.1} parent=11 // pred_fallthru
        _
      // Predicated region
      $region25: #{_gcn_forward_impl.1} parent=11 // pred_check
        %p407 = pneg %p158
      $region26: #{_gcn_forward_impl.1} parent=11 // pred_check_branch
        %409 = sbr.rel (%p407) target = $region28
      $region27: #{_gcn_forward_impl.1} parent=11 // pred_region
        _
      $region28: #{_gcn_forward_impl.1} parent=11 // pred_fallthru
        _
      // Predicated region
      $region29: #{_gcn_forward_impl.1} parent=11 // pred_check
        %p410 = pneg %p179
      $region30: #{_gcn_forward_impl.1} parent=11 // pred_check_branch
        %412 = sbr.rel (%p410) target = $region32
      $region31: #{_gcn_forward_impl.1} parent=11 // pred_region
        _
      $region32: #{_gcn_forward_impl.1} parent=11 // pred_fallthru
        _
      // Predicated region
      $region33: #{_gcn_forward_impl.1} parent=11 // pred_check
        %p413 = pneg %p200
      $region34: #{_gcn_forward_impl.1} parent=11 // pred_check_branch
        %415 = sbr.rel (%p413) target = $region36
      $region35: #{_gcn_forward_impl.1} parent=11 // pred_region
        _
      $region36: #{_gcn_forward_impl.1} parent=11 // pred_fallthru
        _
      // Predicated region
      $region37: #{_gcn_forward_impl.1} parent=11 // pred_check
        %p416 = pneg %p221
      $region38: #{_gcn_forward_impl.1} parent=11 // pred_check_branch
        %418 = sbr.rel (%p416) target = $region40
      $region39: #{_gcn_forward_impl.1} parent=11 // pred_region
        _
      $region40: #{_gcn_forward_impl.1} parent=11 // pred_fallthru
        _
      // Predicated region
      $region41: #{_gcn_forward_impl.1} parent=11 // pred_check
        %p419 = pneg %p242
      $region42: #{_gcn_forward_impl.1} parent=11 // pred_check_branch
        %421 = sbr.rel (%p419) target = $region44
      $region43: #{_gcn_forward_impl.1} parent=11 // pred_region
        _
      $region44: #{_gcn_forward_impl.1} parent=11 // pred_fallthru
        _
      // Predicated region
      $region45: #{_gcn_forward_impl.1} parent=11 // pred_check
        %p422 = pneg %p263
      $region46: #{_gcn_forward_impl.1} parent=11 // pred_check_branch
        %424 = sbr.rel (%p422) target = $region48
      $region47: #{_gcn_forward_impl.1} parent=11 // pred_region
        _
      $region48: #{_gcn_forward_impl.1} parent=11 // pred_fallthru
        _
      // Predicated region
      $region49: #{_gcn_forward_impl.1} parent=11 // pred_check
        %p425 = pneg %p284
      $region50: #{_gcn_forward_impl.1} parent=11 // pred_check_branch
        %427 = sbr.rel (%p425) target = $region52
      $region51: #{_gcn_forward_impl.1} parent=11 // pred_region
        _
      $region52: #{_gcn_forward_impl.1} parent=11 // pred_fallthru
        _
      // Predicated region
      $region53: #{_gcn_forward_impl.1} parent=11 // pred_check
        %p428 = pneg %p305
      $region54: #{_gcn_forward_impl.1} parent=11 // pred_check_branch
        %430 = sbr.rel (%p428) target = $region56
      $region55: #{_gcn_forward_impl.1} parent=11 // pred_region
        _
      $region56: #{_gcn_forward_impl.1} parent=11 // pred_fallthru
        _
    $region12: #{_gcn_forward_impl.1} parent=5 // pred_fallthru
      _
    %p431 = scmp.lt.s32.totalorder %s22, 2
    // Predicated region
    $region57: #{_gcn_forward_impl.1} parent=5 // pred_check
      %p432 = pneg %p431
    $region58: #{_gcn_forward_impl.1} parent=5 // pred_check_branch
      %434 = sbr.rel (%p432) target = $region60
    $region59: #{_gcn_forward_impl.1} parent=5 // pred_region
      // Predicated region
      $region61: #{_gcn_forward_impl.1} parent=59 // pred_check
        %p435 = pneg %p42
      $region62: #{_gcn_forward_impl.1} parent=59 // pred_check_branch
        %437 = sbr.rel (%p435) target = $region64
      $region63: #{_gcn_forward_impl.1} parent=59 // pred_region
        %p438 = scmp.lt.s32.totalorder %s22, 1
        %s439 = scalar_select %p438, %s22, 1
        %s440 = smul.addr %s439, 4
        %s441 = smul.addr %s440, 4
        %s442 = scalar_lea.vmem %s0, %s441
      $region64: #{_gcn_forward_impl.1} parent=59 // pred_fallthru
        _
      // Predicated region
      $region65: #{_gcn_forward_impl.1} parent=59 // pred_check
        %p443 = pneg %p68
      $region66: #{_gcn_forward_impl.1} parent=59 // pred_check_branch
        %445 = sbr.rel (%p443) target = $region68
      $region67: #{_gcn_forward_impl.1} parent=59 // pred_region
        %p446 = scmp.lt.s32.totalorder %s22, 1
        %s447 = scalar_select %p446, %s22, 1
        %s448 = smul.addr %s447, 4
        %s449 = smul.addr %s448, 4
        %s450 = scalar_lea.vmem %s1, %s449
      $region68: #{_gcn_forward_impl.1} parent=59 // pred_fallthru
        _
    $region60: #{_gcn_forward_impl.1} parent=5 // pred_fallthru
      _
    %p451 = scmp.le.s32.totalorder 1, %s22
    %p452 = scmp.lt.s32.totalorder %s22, 3
    %p453 = pnand %p451, %p452
    %p454 = pneg %p453
    // Predicated region
    $region69: #{_gcn_forward_impl.1} parent=5 // pred_check
      _
    $region70: #{_gcn_forward_impl.1} parent=5 // pred_check_branch
      %456 = sbr.rel (%p453) target = $region72
    $region71: #{_gcn_forward_impl.1} parent=5 // pred_region
      %s457 = ssub.s32 %s22, 1
      %p458 = scmp.lt.s32.totalorder %s27, 1
      %s459 = scalar_select %p458, %s27, 1
      %s460 = smul.addr %s459, 4
      %s461 = smul.addr %s460, 4
      %s462 = scalar_lea.vmem %s0, %s461
      %p463 = pneg %p48
      %p464 = pneg %p45
      %p465 = scmp.lt.s32.totalorder %s27, 1
      %s466 = scalar_select %p465, %s27, 1
      %s467 = smul.addr %s466, 4
      %s468 = smul.addr %s467, 4
      %s469 = scalar_lea.vmem %s1, %s468
      %p470 = pneg %p74
      %p471 = pneg %p71
      %p472 = pneg %p95
      %p473 = pneg %p92
      %p474 = pneg %p116
      %p475 = pneg %p113
      %p476 = pneg %p137
      %p477 = pneg %p134
      %p478 = pneg %p158
      %p479 = pneg %p155
      %p480 = pneg %p179
      %p481 = pneg %p176
      %p482 = pneg %p200
      %p483 = pneg %p197
      %p484 = pneg %p221
      %p485 = pneg %p218
      %p486 = pneg %p242
      %p487 = pneg %p239
      %p488 = pneg %p263
      %p489 = pneg %p260
      %p490 = pneg %p284
      %p491 = pneg %p281
      %p492 = pneg %p305
      %p493 = pneg %p302
      %p494 = pneg %p331
      %p495 = pneg %p328
      %p496 = scmp.lt.s32.totalorder %s27, 1
      %s497 = scalar_select %p496, %s27, 1
      %s498 = smul.addr %s497, 8
      %s499 = scalar_lea.vmem %s13, %s498
      %p500 = pneg %p357
      %p501 = pneg %p354
      %p502 = scmp.lt.s32.totalorder %s27, 1
      %s503 = scalar_select %p502, %s27, 1
      %s504 = smul.addr %s503, 8
      %s505 = scalar_lea.vmem %s14, %s504
      %p506 = pneg %p383
      %p507 = pneg %p380
      %p508 = scmp.lt.s32.totalorder %s27, 1
      %s509 = scalar_select %p508, %s27, 1
      %s510 = smul.addr %s509, 2
      %s511 = smul.addr %s510, 8
      %s512 = scalar_lea.vmem %s15, %s511
      %p513 = scmp.lt.s32.totalorder %s27, 1
      %s514 = scalar_select %p513, %s27, 1
      %s515 = smul.addr %s514, 4
      %s516 = smul.addr %s515, 4
      %s517 = scalar_lea.vmem %s0, %s516
      %p518 = scmp.lt.s32.totalorder %s27, 1
      %s519 = scalar_select %p518, %s27, 1
      %s520 = smul.addr %s519, 4
      %s521 = smul.addr %s520, 4
      %s522 = scalar_lea.vmem %s1, %s521
      %p523 = scmp.lt.s32.totalorder %s27, 1
      %s524 = scalar_select %p523, %s27, 1
      %s525 = smul.addr %s524, 8
      %s526 = scalar_lea.vmem %s13, %s525
      %p527 = scmp.lt.s32.totalorder %s27, 1
      %s528 = scalar_select %p527, %s27, 1
      %s529 = smul.addr %s528, 8
      %s530 = scalar_lea.vmem %s14, %s529
      %p531 = scmp.lt.s32.totalorder %s27, 1
      %s532 = scalar_select %p531, %s27, 1
      %s533 = smul.addr %s532, 2
      %s534 = smul.addr %s533, 8
      %s535 = scalar_lea.vmem %s15, %s534
      %v537 = vld [vmem:[%s517] sm:$0xf]
      %v538 = vld [vmem:[%s517 + $0x4] sm:$0xf]
      %v539 = vld [vmem:[%s517 + $0x8] sm:$0xf]
      %v540 = vld [vmem:[%s517 + $0xc] sm:$0xf]
      %v541 = vld [vmem:[%s522] sm:$0xf]
      %v542 = vld [vmem:[%s522 + $0x4] sm:$0xf]
      %v543 = vld [vmem:[%s522 + $0x8] sm:$0xf]
      %v544 = vld [vmem:[%s522 + $0xc] sm:$0xf]
      %v545 = vld [vmem:[%s2] sm:$0xf]
      %v546 = vld [vmem:[%s2 + $0x4] sm:$0xf]
      %v547 = vld [vmem:[%s2 + $0x8] sm:$0xf]
      %v548 = vld [vmem:[%s2 + $0xc] sm:$0xf]
      %v549 = vld [vmem:[%s2 + $0x10] sm:$0xf]
      %v550 = vld [vmem:[%s2 + $0x14] sm:$0xf]
      %v551 = vld [vmem:[%s2 + $0x18] sm:$0xf]
      %v552 = vld [vmem:[%s2 + $0x1c] sm:$0xf]
      %v553 = vld [vmem:[%s2 + $0x20] sm:$0xf]
      %v554 = vld [vmem:[%s2 + $0x24] sm:$0xf]
      %v555 = vld [vmem:[%s2 + $0x28] sm:$0xf]
      %v556 = vld [vmem:[%s2 + $0x2c] sm:$0xf]
      %v557 = vld [vmem:[%s2 + $0x30] sm:$0xf]
      %v558 = vld [vmem:[%s2 + $0x34] sm:$0xf]
      %v559 = vld [vmem:[%s2 + $0x38] sm:$0xf]
      %v560 = vld [vmem:[%s2 + $0x3c] sm:$0xf]
      %v565 = vunpack.c.l.b16 %v541
      %v566 = vunpack.c.l.b16 %v542
      %v567 = vunpack.c.l.b16 %v543
      %v568 = vunpack.c.l.b16 %v544
      %v569 = vpack.c.b16 %v566, %v565
      %v570 = vpack.c.b16 %v568, %v567
      %v589 = vunpack.c.l.b16 %v545
      %v590 = vunpack.c.l.b16 %v546
      %v591 = vunpack.c.l.b16 %v547
      %v592 = vunpack.c.l.b16 %v548
      %v593 = vunpack.c.l.b16 %v549
      %v594 = vunpack.c.l.b16 %v550
      %v595 = vunpack.c.l.b16 %v551
      %v596 = vunpack.c.l.b16 %v552
      %v597 = vunpack.c.l.b16 %v553
      %v598 = vunpack.c.l.b16 %v554
      %v599 = vunpack.c.l.b16 %v555
      %v600 = vunpack.c.l.b16 %v556
      %v601 = vunpack.c.l.b16 %v557
      %v602 = vunpack.c.l.b16 %v558
      %v603 = vunpack.c.l.b16 %v559
      %v604 = vunpack.c.l.b16 %v560
      %v605 = vpack.c.b16 %v590, %v589
      %v606 = vpack.c.b16 %v592, %v591
      %v607 = vpack.c.b16 %v594, %v593
      %v608 = vpack.c.b16 %v596, %v595
      %v609 = vpack.c.b16 %v598, %v597
      %v610 = vpack.c.b16 %v600, %v599
      %v611 = vpack.c.b16 %v602, %v601
      %v612 = vpack.c.b16 %v604, %v603
      %621 = vmatpush.bf16.msra.mxu0 %v612
      %622 = vmatpush.bf16.msra.mxu0 %v611
      %623 = vmatpush.bf16.msra.mxu0 %v610
      %624 = vmatpush.bf16.msra.mxu0 %v609
      %625 = vmatpush.bf16.msra.mxu0 %v608
      %626 = vmatpush.bf16.msra.mxu0 %v607
      %627 = vmatpush.bf16.msra.mxu0 %v606
      %628 = vmatpush.bf16.msra.mxu0 %v605
      %629 = vmatmul.bf16.gmra.mxu0 %v569
      %v630 = vpop.f32.mrf.mxu0
      %v631 = vadd.f32 0.0, %v630
      %v632 = vpop.f32.mrf.mxu0
      %v633 = vadd.f32 0.0, %v632
      %634 = vmatmul.bf16.gmra.mxu0 %v570
      %v635 = vpop.f32.mrf.mxu0
      %v636 = vadd.f32 0.0, %v635
      %v637 = vpop.f32.mrf.mxu0
      %v638 = vadd.f32 0.0, %v637
      %639 = vdwg.mxu0
      %v640 = vpack.c.bf16 %v633, %v631
      %v641 = vpack.c.bf16 %v638, %v636
      %v642 = vld [vmem:[%s3] sm:$0x1]
      %v644 = vperm.slane %v642, 0
      %v650 = vunpack.c.l.b16 %v537
      %v651 = vunpack.c.l.b16 %v538
      %v652 = vunpack.c.l.b16 %v539
      %v653 = vunpack.c.l.b16 %v540
      %v654 = vpack.c.b16 %v651, %v650
      %v655 = vpack.c.b16 %v653, %v652
      %vm656 = vcmask 261120
      %v658 = vsel %vm656, %v654, 0
      %v661 = vsel %vm656, %v655, 0
      %663 = vmatpush.bf16.msra.mxu0 0
      %664 = vmatpush.bf16.msra.mxu0 0
      %665 = vmatpush.bf16.msra.mxu0 0
      %666 = vmatpush.bf16.msra.mxu0 0
      %667 = vmatpush.bf16.msra.mxu0 0
      %668 = vmatpush.bf16.msra.mxu0 0
      %669 = vmatpush.bf16.msra.mxu0 %v641
      %670 = vmatpush.bf16.msra.mxu0 %v640
      %671 = vmatmul.bf16.gmra.mxu0 %v658
      %v672 = vpop.f32.mrf.mxu0
      %v673 = vadd.f32 %v644, %v672
      %v674 = vpop.f32.mrf.mxu0
      %v675 = vadd.f32 %v644, %v674
      %676 = vmatmul.bf16.gmra.mxu0 %v661
      %v677 = vpop.f32.mrf.mxu0
      %v678 = vadd.f32 %v644, %v677
      %v679 = vpop.f32.mrf.mxu0
      %v680 = vadd.f32 %v644, %v679
      %681 = vdwg.mxu0
      %v682 = vmax.f32 %v673, 0.0
      %v683 = vmax.f32 %v675, 0.0
      %v684 = vmax.f32 %v678, 0.0
      %v685 = vmax.f32 %v680, 0.0
      %v686 = vpack.c.bf16 %v683, %v682
      %v687 = vpack.c.bf16 %v685, %v684
      %v688 = vld [vmem:[%s4] sm:$0xf]
      %v689 = vld [vmem:[%s4 + $0x4] sm:$0xf]
      %v690 = vld [vmem:[%s4 + $0x8] sm:$0xf]
      %v691 = vld [vmem:[%s4 + $0xc] sm:$0xf]
      %v692 = vld [vmem:[%s4 + $0x10] sm:$0xf]
      %v693 = vld [vmem:[%s4 + $0x14] sm:$0xf]
      %v694 = vld [vmem:[%s4 + $0x18] sm:$0xf]
      %v695 = vld [vmem:[%s4 + $0x1c] sm:$0xf]
      %v696 = vld [vmem:[%s4 + $0x20] sm:$0xf]
      %v697 = vld [vmem:[%s4 + $0x24] sm:$0xf]
      %v698 = vld [vmem:[%s4 + $0x28] sm:$0xf]
      %v699 = vld [vmem:[%s4 + $0x2c] sm:$0xf]
      %v700 = vld [vmem:[%s4 + $0x30] sm:$0xf]
      %v701 = vld [vmem:[%s4 + $0x34] sm:$0xf]
      %v702 = vld [vmem:[%s4 + $0x38] sm:$0xf]
      %v703 = vld [vmem:[%s4 + $0x3c] sm:$0xf]
      %v704 = vld [vmem:[%s5] sm:$0xf]
      %v705 = vld [vmem:[%s5 + $0x4] sm:$0xf]
      %v706 = vld [vmem:[%s5 + $0x8] sm:$0xf]
      %v707 = vld [vmem:[%s5 + $0xc] sm:$0xf]
      %v708 = vld [vmem:[%s5 + $0x10] sm:$0xf]
      %v709 = vld [vmem:[%s5 + $0x14] sm:$0xf]
      %v710 = vld [vmem:[%s5 + $0x18] sm:$0xf]
      %v711 = vld [vmem:[%s5 + $0x1c] sm:$0xf]
      %v712 = vld [vmem:[%s5 + $0x20] sm:$0xf]
      %v713 = vld [vmem:[%s5 + $0x24] sm:$0xf]
      %v714 = vld [vmem:[%s5 + $0x28] sm:$0xf]
      %v715 = vld [vmem:[%s5 + $0x2c] sm:$0xf]
      %v716 = vld [vmem:[%s5 + $0x30] sm:$0xf]
      %v717 = vld [vmem:[%s5 + $0x34] sm:$0xf]
      %v718 = vld [vmem:[%s5 + $0x38] sm:$0xf]
      %v719 = vld [vmem:[%s5 + $0x3c] sm:$0xf]
      %v736 = vunpack.c.l.b16 %v704
      %v737 = vunpack.c.l.b16 %v705
      %v738 = vunpack.c.l.b16 %v706
      %v739 = vunpack.c.l.b16 %v707
      %v740 = vunpack.c.l.b16 %v708
      %v741 = vunpack.c.l.b16 %v709
      %v742 = vunpack.c.l.b16 %v710
      %v743 = vunpack.c.l.b16 %v711
      %v744 = vunpack.c.l.b16 %v712
      %v745 = vunpack.c.l.b16 %v713
      %v746 = vunpack.c.l.b16 %v714
      %v747 = vunpack.c.l.b16 %v715
      %v748 = vunpack.c.l.b16 %v716
      %v749 = vunpack.c.l.b16 %v717
      %v750 = vunpack.c.l.b16 %v718
      %v751 = vunpack.c.l.b16 %v719
      %v752 = vpack.c.b16 %v737, %v736
      %v753 = vpack.c.b16 %v739, %v738
      %v754 = vpack.c.b16 %v741, %v740
      %v755 = vpack.c.b16 %v743, %v742
      %v756 = vpack.c.b16 %v745, %v744
      %v757 = vpack.c.b16 %v747, %v746
      %v758 = vpack.c.b16 %v749, %v748
      %v759 = vpack.c.b16 %v751, %v750
      %768 = vmatpush.bf16.msra.mxu0 %v759
      %769 = vmatpush.bf16.msra.mxu0 %v758
      %770 = vmatpush.bf16.msra.mxu0 %v757
      %771 = vmatpush.bf16.msra.mxu0 %v756
      %772 = vmatpush.bf16.msra.mxu0 %v755
      %773 = vmatpush.bf16.msra.mxu0 %v754
      %774 = vmatpush.bf16.msra.mxu0 %v753
      %775 = vmatpush.bf16.msra.mxu0 %v752
      %776 = vmatmul.bf16.gmra.mxu0 %v569
      %v777 = vpop.f32.mrf.mxu0
      %v778 = vadd.f32 0.0, %v777
      %v779 = vpop.f32.mrf.mxu0
      %v780 = vadd.f32 0.0, %v779
      %781 = vmatmul.bf16.gmra.mxu0 %v570
      %v782 = vpop.f32.mrf.mxu0
      %v783 = vadd.f32 0.0, %v782
      %v784 = vpop.f32.mrf.mxu0
      %v785 = vadd.f32 0.0, %v784
      %786 = vdwg.mxu0
      %v803 = vunpack.c.l.b16 %v688
      %v804 = vunpack.c.l.b16 %v689
      %v805 = vunpack.c.l.b16 %v690
      %v806 = vunpack.c.l.b16 %v691
      %v807 = vunpack.c.l.b16 %v692
      %v808 = vunpack.c.l.b16 %v693
      %v809 = vunpack.c.l.b16 %v694
      %v810 = vunpack.c.l.b16 %v695
      %v811 = vunpack.c.l.b16 %v696
      %v812 = vunpack.c.l.b16 %v697
      %v813 = vunpack.c.l.b16 %v698
      %v814 = vunpack.c.l.b16 %v699
      %v815 = vunpack.c.l.b16 %v700
      %v816 = vunpack.c.l.b16 %v701
      %v817 = vunpack.c.l.b16 %v702
      %v818 = vunpack.c.l.b16 %v703
      %v819 = vpack.c.b16 %v804, %v803
      %v820 = vpack.c.b16 %v806, %v805
      %v821 = vpack.c.b16 %v808, %v807
      %v822 = vpack.c.b16 %v810, %v809
      %v823 = vpack.c.b16 %v812, %v811
      %v824 = vpack.c.b16 %v814, %v813
      %v825 = vpack.c.b16 %v816, %v815
      %v826 = vpack.c.b16 %v818, %v817
      %835 = vmatpush.bf16.msra.mxu0 %v826
      %836 = vmatpush.bf16.msra.mxu0 %v825
      %837 = vmatpush.bf16.msra.mxu0 %v824
      %838 = vmatpush.bf16.msra.mxu0 %v823
      %839 = vmatpush.bf16.msra.mxu0 %v822
      %840 = vmatpush.bf16.msra.mxu0 %v821
      %841 = vmatpush.bf16.msra.mxu0 %v820
      %842 = vmatpush.bf16.msra.mxu0 %v819
      %843 = vmatmul.bf16.gmra.mxu0 %v686
      %v844 = vpop.f32.mrf.mxu0
      %v845 = vadd.f32 %v778, %v844
      %v846 = vpop.f32.mrf.mxu0
      %v847 = vadd.f32 %v780, %v846
      %848 = vmatmul.bf16.gmra.mxu0 %v687
      %v849 = vpop.f32.mrf.mxu0
      %v850 = vadd.f32 %v783, %v849
      %v851 = vpop.f32.mrf.mxu0
      %v852 = vadd.f32 %v785, %v851
      %853 = vdwg.mxu0
      %v854 = vpack.c.bf16 %v847, %v845
      %v855 = vpack.c.bf16 %v852, %v850
      %v856 = vld [vmem:[%s6] sm:$0x1]
      %v858 = vperm.slane %v856, 0
      %860 = vmatpush.bf16.msra.mxu0 0
      %861 = vmatpush.bf16.msra.mxu0 0
      %862 = vmatpush.bf16.msra.mxu0 0
      %863 = vmatpush.bf16.msra.mxu0 0
      %864 = vmatpush.bf16.msra.mxu0 0
      %865 = vmatpush.bf16.msra.mxu0 0
      %866 = vmatpush.bf16.msra.mxu0 %v855
      %867 = vmatpush.bf16.msra.mxu0 %v854
      %868 = vmatmul.bf16.gmra.mxu0 %v658
      %v869 = vpop.f32.mrf.mxu0
      %v870 = vadd.f32 %v858, %v869
      %v871 = vpop.f32.mrf.mxu0
      %v872 = vadd.f32 %v858, %v871
      %873 = vmatmul.bf16.gmra.mxu0 %v661
      %v874 = vpop.f32.mrf.mxu0
      %v875 = vadd.f32 %v858, %v874
      %v876 = vpop.f32.mrf.mxu0
      %v877 = vadd.f32 %v858, %v876
      %878 = vdwg.mxu0
      %v879 = vmax.f32 %v870, 0.0
      %v880 = vmax.f32 %v872, 0.0
      %v881 = vmax.f32 %v875, 0.0
      %v882 = vmax.f32 %v877, 0.0
      %v883 = vpack.c.bf16 %v880, %v879
      %v884 = vpack.c.bf16 %v882, %v881
      %v885 = vld [vmem:[%s7] sm:$0xff]
      %v886 = vld [vmem:[%s7 + $0x8] sm:$0xff]
      %v887 = vld [vmem:[%s7 + $0x10] sm:$0xff]
      %v888 = vld [vmem:[%s7 + $0x18] sm:$0xff]
      %v889 = vld [vmem:[%s7 + $0x20] sm:$0xff]
      %v890 = vld [vmem:[%s7 + $0x28] sm:$0xff]
      %v891 = vld [vmem:[%s7 + $0x30] sm:$0xff]
      %v892 = vld [vmem:[%s7 + $0x38] sm:$0xff]
      %v893 = vld [vmem:[%s7 + $0x40] sm:$0xff]
      %v894 = vld [vmem:[%s7 + $0x48] sm:$0xff]
      %v895 = vld [vmem:[%s7 + $0x50] sm:$0xff]
      %v896 = vld [vmem:[%s7 + $0x58] sm:$0xff]
      %v897 = vld [vmem:[%s7 + $0x60] sm:$0xff]
      %v898 = vld [vmem:[%s7 + $0x68] sm:$0xff]
      %v899 = vld [vmem:[%s7 + $0x70] sm:$0xff]
      %v900 = vld [vmem:[%s7 + $0x78] sm:$0xff]
      %v901 = vld [vmem:[%s8] sm:$0xff]
      %v902 = vld [vmem:[%s8 + $0x8] sm:$0xff]
      %v903 = vld [vmem:[%s8 + $0x10] sm:$0xff]
      %v904 = vld [vmem:[%s8 + $0x18] sm:$0xff]
      %v905 = vld [vmem:[%s8 + $0x20] sm:$0xff]
      %v906 = vld [vmem:[%s8 + $0x28] sm:$0xff]
      %v907 = vld [vmem:[%s8 + $0x30] sm:$0xff]
      %v908 = vld [vmem:[%s8 + $0x38] sm:$0xff]
      %v909 = vld [vmem:[%s8 + $0x40] sm:$0xff]
      %v910 = vld [vmem:[%s8 + $0x48] sm:$0xff]
      %v911 = vld [vmem:[%s8 + $0x50] sm:$0xff]
      %v912 = vld [vmem:[%s8 + $0x58] sm:$0xff]
      %v913 = vld [vmem:[%s8 + $0x60] sm:$0xff]
      %v914 = vld [vmem:[%s8 + $0x68] sm:$0xff]
      %v915 = vld [vmem:[%s8 + $0x70] sm:$0xff]
      %v916 = vld [vmem:[%s8 + $0x78] sm:$0xff]
      %v933 = vunpack.c.l.b16 %v901
      %v934 = vunpack.c.h.b16 %v901
      %v935 = vunpack.c.l.b16 %v902
      %v936 = vunpack.c.h.b16 %v902
      %v937 = vunpack.c.l.b16 %v903
      %v938 = vunpack.c.h.b16 %v903
      %v939 = vunpack.c.l.b16 %v904
      %v940 = vunpack.c.h.b16 %v904
      %v941 = vunpack.c.l.b16 %v905
      %v942 = vunpack.c.h.b16 %v905
      %v943 = vunpack.c.l.b16 %v906
      %v944 = vunpack.c.h.b16 %v906
      %v945 = vunpack.c.l.b16 %v907
      %v946 = vunpack.c.h.b16 %v907
      %v947 = vunpack.c.l.b16 %v908
      %v948 = vunpack.c.h.b16 %v908
      %v949 = vunpack.c.l.b16 %v909
      %v950 = vunpack.c.h.b16 %v909
      %v951 = vunpack.c.l.b16 %v910
      %v952 = vunpack.c.h.b16 %v910
      %v953 = vunpack.c.l.b16 %v911
      %v954 = vunpack.c.h.b16 %v911
      %v955 = vunpack.c.l.b16 %v912
      %v956 = vunpack.c.h.b16 %v912
      %v957 = vunpack.c.l.b16 %v913
      %v958 = vunpack.c.h.b16 %v913
      %v959 = vunpack.c.l.b16 %v914
      %v960 = vunpack.c.h.b16 %v914
      %v961 = vunpack.c.l.b16 %v915
      %v962 = vunpack.c.h.b16 %v915
      %v963 = vunpack.c.l.b16 %v916
      %v964 = vunpack.c.h.b16 %v916
      %v965 = vpack.c.b16 %v935, %v933
      %v966 = vpack.c.b16 %v936, %v934
      %v967 = vpack.c.b16 %v939, %v937
      %v968 = vpack.c.b16 %v940, %v938
      %v969 = vpack.c.b16 %v943, %v941
      %v970 = vpack.c.b16 %v944, %v942
      %v971 = vpack.c.b16 %v947, %v945
      %v972 = vpack.c.b16 %v948, %v946
      %v973 = vpack.c.b16 %v951, %v949
      %v974 = vpack.c.b16 %v952, %v950
      %v975 = vpack.c.b16 %v955, %v953
      %v976 = vpack.c.b16 %v956, %v954
      %v977 = vpack.c.b16 %v959, %v957
      %v978 = vpack.c.b16 %v960, %v958
      %v979 = vpack.c.b16 %v963, %v961
      %v980 = vpack.c.b16 %v964, %v962
      %997 = vmatpush.bf16.msra.mxu0 %v979
      %998 = vmatpush.bf16.msra.mxu0 %v977
      %999 = vmatpush.bf16.msra.mxu0 %v975
      %1000 = vmatpush.bf16.msra.mxu0 %v973
      %1001 = vmatpush.bf16.msra.mxu0 %v971
      %1002 = vmatpush.bf16.msra.mxu0 %v969
      %1003 = vmatpush.bf16.msra.mxu0 %v967
      %1004 = vmatpush.bf16.msra.mxu0 %v965
      %1005 = vmatmul.bf16.gmra.mxu0 %v569
      %v1006 = vpop.f32.mrf.mxu0
      %v1007 = vadd.f32 0.0, %v1006
      %v1008 = vpop.f32.mrf.mxu0
      %v1009 = vadd.f32 0.0, %v1008
      %1010 = vmatmul.bf16.gmra.mxu0 %v570
      %v1011 = vpop.f32.mrf.mxu0
      %v1012 = vadd.f32 0.0, %v1011
      %v1013 = vpop.f32.mrf.mxu0
      %v1014 = vadd.f32 0.0, %v1013
      %1015 = vdwg.mxu0
      %1016 = vmatpush.bf16.msra.mxu0 %v980
      %1017 = vmatpush.bf16.msra.mxu0 %v978
      %1018 = vmatpush.bf16.msra.mxu0 %v976
      %1019 = vmatpush.bf16.msra.mxu0 %v974
      %1020 = vmatpush.bf16.msra.mxu0 %v972
      %1021 = vmatpush.bf16.msra.mxu0 %v970
      %1022 = vmatpush.bf16.msra.mxu0 %v968
      %1023 = vmatpush.bf16.msra.mxu0 %v966
      %1024 = vmatmul.bf16.gmra.mxu0 %v569
      %v1025 = vpop.f32.mrf.mxu0
      %v1026 = vadd.f32 0.0, %v1025
      %v1027 = vpop.f32.mrf.mxu0
      %v1028 = vadd.f32 0.0, %v1027
      %1029 = vmatmul.bf16.gmra.mxu0 %v570
      %v1030 = vpop.f32.mrf.mxu0
      %v1031 = vadd.f32 0.0, %v1030
      %v1032 = vpop.f32.mrf.mxu0
      %v1033 = vadd.f32 0.0, %v1032
      %1034 = vdwg.mxu0
      %v1051 = vunpack.c.l.b16 %v885
      %v1052 = vunpack.c.h.b16 %v885
      %v1053 = vunpack.c.l.b16 %v886
      %v1054 = vunpack.c.h.b16 %v886
      %v1055 = vunpack.c.l.b16 %v887
      %v1056 = vunpack.c.h.b16 %v887
      %v1057 = vunpack.c.l.b16 %v888
      %v1058 = vunpack.c.h.b16 %v888
      %v1059 = vunpack.c.l.b16 %v889
      %v1060 = vunpack.c.h.b16 %v889
      %v1061 = vunpack.c.l.b16 %v890
      %v1062 = vunpack.c.h.b16 %v890
      %v1063 = vunpack.c.l.b16 %v891
      %v1064 = vunpack.c.h.b16 %v891
      %v1065 = vunpack.c.l.b16 %v892
      %v1066 = vunpack.c.h.b16 %v892
      %v1067 = vunpack.c.l.b16 %v893
      %v1068 = vunpack.c.h.b16 %v893
      %v1069 = vunpack.c.l.b16 %v894
      %v1070 = vunpack.c.h.b16 %v894
      %v1071 = vunpack.c.l.b16 %v895
      %v1072 = vunpack.c.h.b16 %v895
      %v1073 = vunpack.c.l.b16 %v896
      %v1074 = vunpack.c.h.b16 %v896
      %v1075 = vunpack.c.l.b16 %v897
      %v1076 = vunpack.c.h.b16 %v897
      %v1077 = vunpack.c.l.b16 %v898
      %v1078 = vunpack.c.h.b16 %v898
      %v1079 = vunpack.c.l.b16 %v899
      %v1080 = vunpack.c.h.b16 %v899
      %v1081 = vunpack.c.l.b16 %v900
      %v1082 = vunpack.c.h.b16 %v900
      %v1083 = vpack.c.b16 %v1053, %v1051
      %v1084 = vpack.c.b16 %v1054, %v1052
      %v1085 = vpack.c.b16 %v1057, %v1055
      %v1086 = vpack.c.b16 %v1058, %v1056
      %v1087 = vpack.c.b16 %v1061, %v1059
      %v1088 = vpack.c.b16 %v1062, %v1060
      %v1089 = vpack.c.b16 %v1065, %v1063
      %v1090 = vpack.c.b16 %v1066, %v1064
      %v1091 = vpack.c.b16 %v1069, %v1067
      %v1092 = vpack.c.b16 %v1070, %v1068
      %v1093 = vpack.c.b16 %v1073, %v1071
      %v1094 = vpack.c.b16 %v1074, %v1072
      %v1095 = vpack.c.b16 %v1077, %v1075
      %v1096 = vpack.c.b16 %v1078, %v1076
      %v1097 = vpack.c.b16 %v1081, %v1079
      %v1098 = vpack.c.b16 %v1082, %v1080
      %1115 = vmatpush.bf16.msra.mxu0 %v1097
      %1116 = vmatpush.bf16.msra.mxu0 %v1095
      %1117 = vmatpush.bf16.msra.mxu0 %v1093
      %1118 = vmatpush.bf16.msra.mxu0 %v1091
      %1119 = vmatpush.bf16.msra.mxu0 %v1089
      %1120 = vmatpush.bf16.msra.mxu0 %v1087
      %1121 = vmatpush.bf16.msra.mxu0 %v1085
      %1122 = vmatpush.bf16.msra.mxu0 %v1083
      %1123 = vmatmul.bf16.gmra.mxu0 %v883
      %v1124 = vpop.f32.mrf.mxu0
      %v1125 = vadd.f32 %v1007, %v1124
      %v1126 = vpop.f32.mrf.mxu0
      %v1127 = vadd.f32 %v1009, %v1126
      %1128 = vmatmul.bf16.gmra.mxu0 %v884
      %v1129 = vpop.f32.mrf.mxu0
      %v1130 = vadd.f32 %v1012, %v1129
      %v1131 = vpop.f32.mrf.mxu0
      %v1132 = vadd.f32 %v1014, %v1131
      %1133 = vdwg.mxu0
      %1134 = vmatpush.bf16.msra.mxu0 %v1098
      %1135 = vmatpush.bf16.msra.mxu0 %v1096
      %1136 = vmatpush.bf16.msra.mxu0 %v1094
      %1137 = vmatpush.bf16.msra.mxu0 %v1092
      %1138 = vmatpush.bf16.msra.mxu0 %v1090
      %1139 = vmatpush.bf16.msra.mxu0 %v1088
      %1140 = vmatpush.bf16.msra.mxu0 %v1086
      %1141 = vmatpush.bf16.msra.mxu0 %v1084
      %1142 = vmatmul.bf16.gmra.mxu0 %v883
      %v1143 = vpop.f32.mrf.mxu0
      %v1144 = vadd.f32 %v1026, %v1143
      %v1145 = vpop.f32.mrf.mxu0
      %v1146 = vadd.f32 %v1028, %v1145
      %1147 = vmatmul.bf16.gmra.mxu0 %v884
      %v1148 = vpop.f32.mrf.mxu0
      %v1149 = vadd.f32 %v1031, %v1148
      %v1150 = vpop.f32.mrf.mxu0
      %v1151 = vadd.f32 %v1033, %v1150
      %1152 = vdwg.mxu0
      %v1153 = vpack.c.bf16 %v1127, %v1125
      %v1154 = vpack.c.bf16 %v1146, %v1144
      %v1155 = vpack.c.bf16 %v1132, %v1130
      %v1156 = vpack.c.bf16 %v1151, %v1149
      %v1157 = vld [vmem:[%s9] sm:$0x3]
      %v1159 = vperm.slane %v1157, 0
      %v1160 = vperm.slane %v1157, 1
      %1163 = vmatpush.bf16.msra.mxu0 0
      %1164 = vmatpush.bf16.msra.mxu0 0
      %1165 = vmatpush.bf16.msra.mxu0 0
      %1166 = vmatpush.bf16.msra.mxu0 0
      %1167 = vmatpush.bf16.msra.mxu0 0
      %1168 = vmatpush.bf16.msra.mxu0 0
      %1169 = vmatpush.bf16.msra.mxu0 %v1155
      %1170 = vmatpush.bf16.msra.mxu0 %v1153
      %1171 = vmatmul.bf16.gmra.mxu0 %v658
      %v1172 = vpop.f32.mrf.mxu0
      %v1173 = vadd.f32 %v1159, %v1172
      %v1174 = vpop.f32.mrf.mxu0
      %v1175 = vadd.f32 %v1159, %v1174
      %1176 = vmatmul.bf16.gmra.mxu0 %v661
      %v1177 = vpop.f32.mrf.mxu0
      %v1178 = vadd.f32 %v1159, %v1177
      %v1179 = vpop.f32.mrf.mxu0
      %v1180 = vadd.f32 %v1159, %v1179
      %1181 = vdwg.mxu0
      %1182 = vmatpush.bf16.msra.mxu0 0
      %1183 = vmatpush.bf16.msra.mxu0 0
      %1184 = vmatpush.bf16.msra.mxu0 0
      %1185 = vmatpush.bf16.msra.mxu0 0
      %1186 = vmatpush.bf16.msra.mxu0 0
      %1187 = vmatpush.bf16.msra.mxu0 0
      %1188 = vmatpush.bf16.msra.mxu0 %v1156
      %1189 = vmatpush.bf16.msra.mxu0 %v1154
      %1190 = vmatmul.bf16.gmra.mxu0 %v658
      %v1191 = vpop.f32.mrf.mxu0
      %v1192 = vadd.f32 %v1160, %v1191
      %v1193 = vpop.f32.mrf.mxu0
      %v1194 = vadd.f32 %v1160, %v1193
      %1195 = vmatmul.bf16.gmra.mxu0 %v661
      %v1196 = vpop.f32.mrf.mxu0
      %v1197 = vadd.f32 %v1160, %v1196
      %v1198 = vpop.f32.mrf.mxu0
      %v1199 = vadd.f32 %v1160, %v1198
      %1200 = vdwg.mxu0
      %v1201 = vmax.f32 %v1173, 0.0
      %v1202 = vmax.f32 %v1192, 0.0
      %v1203 = vmax.f32 %v1175, 0.0
      %v1204 = vmax.f32 %v1194, 0.0
      %v1205 = vmax.f32 %v1178, 0.0
      %v1206 = vmax.f32 %v1197, 0.0
      %v1207 = vmax.f32 %v1180, 0.0
      %v1208 = vmax.f32 %v1199, 0.0
      %v1209 = vmax.f32 %v1201, %v1205
      %v1210 = vmax.f32 %v1203, %v1207
      %v1211 = vmax.f32 %v1209, %v1210
      %v1212 = vrot.slane %v1211, 4
      %v1213 = vmax.f32 %v1211, %v1212
      %v1214 = vrot.slane %v1213, 2
      %v1215 = vmax.f32 %v1213, %v1214
      %v1216 = vrot.slane %v1215, 1
      %v1217 = vmax.f32 %v1215, %v1216
      %v1218 = vmax.f32 %v1202, %v1206
      %v1219 = vmax.f32 %v1204, %v1208
      %v1220 = vmax.f32 %v1218, %v1219
      %v1221 = vrot.slane %v1220, 4
      %v1222 = vmax.f32 %v1220, %v1221
      %v1223 = vrot.slane %v1222, 2
      %v1224 = vmax.f32 %v1222, %v1223
      %v1225 = vrot.slane %v1224, 1
      %v1226 = vmax.f32 %v1224, %v1225
      %v1227 = vlaneseq
      %v1228 = vshrl.u32 %v1227, 7
      %v1229 = vadd.s32 %v1228, 8
      %v1230 = vadd.s32 %v1228, 16
      %v1231 = vadd.s32 %v1228, 24
      %vm1232 = vcmp.ge.f32.partialorder %v1201, %v1217
      %vm1233 = vcmp.ge.f32.partialorder %v1202, %v1226
      %vm1234 = vcmp.ge.f32.partialorder %v1203, %v1217
      %vm1235 = vcmp.ge.f32.partialorder %v1204, %v1226
      %vm1236 = vcmp.ge.f32.partialorder %v1205, %v1217
      %vm1237 = vcmp.ge.f32.partialorder %v1206, %v1226
      %vm1238 = vcmp.ge.f32.partialorder %v1207, %v1217
      %vm1239 = vcmp.ge.f32.partialorder %v1208, %v1226
      %v1240 = vsel %vm1232, %v1228, 1073741824
      %v1241 = vsel %vm1233, %v1228, 1073741824
      %v1242 = vsel %vm1234, %v1229, 1073741824
      %v1243 = vsel %vm1235, %v1229, 1073741824
      %v1244 = vsel %vm1236, %v1230, 1073741824
      %v1245 = vsel %vm1237, %v1230, 1073741824
      %v1246 = vsel %vm1238, %v1231, 1073741824
      %v1247 = vsel %vm1239, %v1231, 1073741824
      %vm1248 = vcmp.lt.s32.totalorder %v1240, %v1244
      %v1249 = vsel %vm1248, %v1240, %v1244
      %vm1250 = vcmp.lt.s32.totalorder %v1242, %v1246
      %v1251 = vsel %vm1250, %v1242, %v1246
      %vm1252 = vcmp.lt.s32.totalorder %v1249, %v1251
      %v1253 = vsel %vm1252, %v1249, %v1251
      %v1254 = vrot.slane %v1253, 4
      %vm1255 = vcmp.lt.s32.totalorder %v1253, %v1254
      %v1256 = vsel %vm1255, %v1253, %v1254
      %v1257 = vrot.slane %v1256, 2
      %vm1258 = vcmp.lt.s32.totalorder %v1256, %v1257
      %v1259 = vsel %vm1258, %v1256, %v1257
      %v1260 = vrot.slane %v1259, 1
      %vm1261 = vcmp.lt.s32.totalorder %v1259, %v1260
      %v1262 = vsel %vm1261, %v1259, %v1260
      %vm1263 = vcmp.lt.s32.totalorder %v1241, %v1245
      %v1264 = vsel %vm1263, %v1241, %v1245
      %vm1265 = vcmp.lt.s32.totalorder %v1243, %v1247
      %v1266 = vsel %vm1265, %v1243, %v1247
      %vm1267 = vcmp.lt.s32.totalorder %v1264, %v1266
      %v1268 = vsel %vm1267, %v1264, %v1266
      %v1269 = vrot.slane %v1268, 4
      %vm1270 = vcmp.lt.s32.totalorder %v1268, %v1269
      %v1271 = vsel %vm1270, %v1268, %v1269
      %v1272 = vrot.slane %v1271, 2
      %vm1273 = vcmp.lt.s32.totalorder %v1271, %v1272
      %v1274 = vsel %vm1273, %v1271, %v1272
      %v1275 = vrot.slane %v1274, 1
      %vm1276 = vcmp.lt.s32.totalorder %v1274, %v1275
      %v1277 = vsel %vm1276, %v1274, %v1275
      %s1278 = smul.u32 %s27, 32
      %v1279 = vstv %s1278
      %v1280 = vadd.s32 %v1262, %v1279
      %v1281 = vadd.s32 %v1277, %v1279
      %v1282 = vld [vmem:[%s10] sm:$0xff]
      %v1283 = vld [vmem:[%s10 + $0x8] sm:$0xff]
      %v1284 = vld [vmem:[%s10 + $0x10] sm:$0xff]
      %v1285 = vld [vmem:[%s10 + $0x18] sm:$0xff]
      %v1286 = vld [vmem:[%s10 + $0x20] sm:$0xff]
      %v1287 = vld [vmem:[%s10 + $0x28] sm:$0xff]
      %v1288 = vld [vmem:[%s10 + $0x30] sm:$0xff]
      %v1289 = vld [vmem:[%s10 + $0x38] sm:$0xff]
      %v1290 = vld [vmem:[%s10 + $0x40] sm:$0xff]
      %v1291 = vld [vmem:[%s10 + $0x48] sm:$0xff]
      %v1292 = vld [vmem:[%s10 + $0x50] sm:$0xff]
      %v1293 = vld [vmem:[%s10 + $0x58] sm:$0xff]
      %v1294 = vld [vmem:[%s10 + $0x60] sm:$0xff]
      %v1295 = vld [vmem:[%s10 + $0x68] sm:$0xff]
      %v1296 = vld [vmem:[%s10 + $0x70] sm:$0xff]
      %v1297 = vld [vmem:[%s10 + $0x78] sm:$0xff]
      %v1298 = vld [vmem:[%s10 + $0x80] sm:$0xff]
      %v1299 = vld [vmem:[%s10 + $0x88] sm:$0xff]
      %v1300 = vld [vmem:[%s10 + $0x90] sm:$0xff]
      %v1301 = vld [vmem:[%s10 + $0x98] sm:$0xff]
      %v1302 = vld [vmem:[%s10 + $0xa0] sm:$0xff]
      %v1303 = vld [vmem:[%s10 + $0xa8] sm:$0xff]
      %v1304 = vld [vmem:[%s10 + $0xb0] sm:$0xff]
      %v1305 = vld [vmem:[%s10 + $0xb8] sm:$0xff]
      %v1306 = vld [vmem:[%s10 + $0xc0] sm:$0xff]
      %v1307 = vld [vmem:[%s10 + $0xc8] sm:$0xff]
      %v1308 = vld [vmem:[%s10 + $0xd0] sm:$0xff]
      %v1309 = vld [vmem:[%s10 + $0xd8] sm:$0xff]
      %v1310 = vld [vmem:[%s10 + $0xe0] sm:$0xff]
      %v1311 = vld [vmem:[%s10 + $0xe8] sm:$0xff]
      %v1312 = vld [vmem:[%s10 + $0xf0] sm:$0xff]
      %v1313 = vld [vmem:[%s10 + $0xf8] sm:$0xff]
      %v1314 = vld [vmem:[%s11] sm:$0x1]
      %v1316 = vperm.slane %v1314, 0
      %1318 = vmatpush.msra.mxu0 %v1297
      %1319 = vmatpush.msra.mxu0 %v1296
      %1320 = vmatpush.msra.mxu0 %v1295
      %1321 = vmatpush.msra.mxu0 %v1294
      %1322 = vmatpush.msra.mxu0 %v1293
      %1323 = vmatpush.msra.mxu0 %v1292
      %1324 = vmatpush.msra.mxu0 %v1291
      %1325 = vmatpush.msra.mxu0 %v1290
      %1326 = vmatpush.msra.mxu0 %v1289
      %1327 = vmatpush.msra.mxu0 %v1288
      %1328 = vmatpush.msra.mxu0 %v1287
      %1329 = vmatpush.msra.mxu0 %v1286
      %1330 = vmatpush.msra.mxu0 %v1285
      %1331 = vmatpush.msra.mxu0 %v1284
      %1332 = vmatpush.msra.mxu0 %v1283
      %1333 = vmatpush.msra.mxu0 %v1282
      %1334 = vmatmul.f32.gmra.mxu0 %v1217
      %v1335 = vpop.f32.mrf.mxu0
      %v1336 = vadd.f32 %v1316, %v1335
      %1337 = vdwg.mxu0
      %1338 = vmatpush.msra.mxu0 %v1313
      %1339 = vmatpush.msra.mxu0 %v1312
      %1340 = vmatpush.msra.mxu0 %v1311
      %1341 = vmatpush.msra.mxu0 %v1310
      %1342 = vmatpush.msra.mxu0 %v1309
      %1343 = vmatpush.msra.mxu0 %v1308
      %1344 = vmatpush.msra.mxu0 %v1307
      %1345 = vmatpush.msra.mxu0 %v1306
      %1346 = vmatpush.msra.mxu0 %v1305
      %1347 = vmatpush.msra.mxu0 %v1304
      %1348 = vmatpush.msra.mxu0 %v1303
      %1349 = vmatpush.msra.mxu0 %v1302
      %1350 = vmatpush.msra.mxu0 %v1301
      %1351 = vmatpush.msra.mxu0 %v1300
      %1352 = vmatpush.msra.mxu0 %v1299
      %1353 = vmatpush.msra.mxu0 %v1298
      %1354 = vmatmul.f32.gmra.mxu0 %v1226
      %v1355 = vpop.f32.mrf.mxu0
      %v1356 = vadd.f32 %v1336, %v1355
      %1357 = vdwg.mxu0
      %v1358 = vld [vmem:[%s12] sm:$0x1]
      %vm1359 = vcmp.gt.f32.partialorder %v1358, 0.0
      %v1360 = vsel %vm1359, 1, 0
      %v1361 = vperm.slane %v1360, 0
      %vm1362 = vcmp.eq.s32.totalorder %v1361, 1
      %v1363 = vsel %vm1362, %v1356, -1e+30
      %1364 = vmax.xlane.f32.xlu0 %v1363
      %v1365 = vpop.xlane.xlu0 %1364
      %v1366 = vsub.f32 %v1356, %v1365
      %v1367 = vmul.f32 %v1366, 1.442695
      %v1368 = vpow.pop %v1367
      %v1369 = vsel %vm1362, %v1368, 0.0
      %1370 = vadd.xlane.f32.xlu0 %v1369
      %v1371 = vpop.xlane.xlu0 %1370
      %v1372 = vlog2.pop %v1371
      %v1373 = vmul.f32 %v1372, 0.6931472
      %v1374 = vsub.f32 %v1366, %v1373
      %1375 = vst [vmem:[%s526] sm:$0xff] %v1374
      %v1376 = vmul.f32 %v1374, 1.442695
      %v1377 = vpow.pop %v1376
      %v1378 = vsel %vm1362, %v1377, 0.0
      %1379 = vst [vmem:[%s530] sm:$0xff] %v1378
      %1380 = vst [vmem:[%s535] sm:$0xff] %v1280
      %1381 = vst [vmem:[%s535 + $0x8] sm:$0xff] %v1281
      %p1382 = scmp.lt.s32.totalorder %s27, 1
      %s1383 = scalar_select %p1382, %s27, 1
      %s1384 = smul.addr %s1383, 8
      %s1385 = scalar_lea.vmem %s13, %s1384
      %p1386 = scmp.lt.s32.totalorder %s27, 1
      %s1387 = scalar_select %p1386, %s27, 1
      %s1388 = smul.addr %s1387, 8
      %s1389 = scalar_lea.vmem %s14, %s1388
      %p1390 = scmp.lt.s32.totalorder %s27, 1
      %s1391 = scalar_select %p1390, %s27, 1
      %s1392 = smul.addr %s1391, 2
      %s1393 = smul.addr %s1392, 8
      %s1394 = scalar_lea.vmem %s15, %s1393
      // Predicated region
      $region73: #{_gcn_forward_impl.1} parent=71 // pred_check
        %p1395 = pneg %p328
      $region74: #{_gcn_forward_impl.1} parent=71 // pred_check_branch
        %1397 = sbr.rel (%p1395) target = $region76
      $region75: #{_gcn_forward_impl.1} parent=71 // pred_region
        _
      $region76: #{_gcn_forward_impl.1} parent=71 // pred_fallthru
        _
      // Predicated region
      $region77: #{_gcn_forward_impl.1} parent=71 // pred_check
        %p1398 = pneg %p354
      $region78: #{_gcn_forward_impl.1} parent=71 // pred_check_branch
        %1400 = sbr.rel (%p1398) target = $region80
      $region79: #{_gcn_forward_impl.1} parent=71 // pred_region
        _
      $region80: #{_gcn_forward_impl.1} parent=71 // pred_fallthru
        _
      // Predicated region
      $region81: #{_gcn_forward_impl.1} parent=71 // pred_check
        %p1401 = pneg %p380
      $region82: #{_gcn_forward_impl.1} parent=71 // pred_check_branch
        %1403 = sbr.rel (%p1401) target = $region84
      $region83: #{_gcn_forward_impl.1} parent=71 // pred_region
        _
      $region84: #{_gcn_forward_impl.1} parent=71 // pred_fallthru
        _
    $region72: #{_gcn_forward_impl.1} parent=5 // pred_fallthru
      _
    %p1404 = scmp.le.s32.totalorder 2, %s22
    // Predicated region
    $region85: #{_gcn_forward_impl.1} parent=5 // pred_check
      %p1405 = pneg %p1404
    $region86: #{_gcn_forward_impl.1} parent=5 // pred_check_branch
      %1407 = sbr.rel (%p1405) target = $region88
    $region87: #{_gcn_forward_impl.1} parent=5 // pred_region
      %s1408 = ssub.s32 %s22, 2
      // Predicated region
      $region89: #{_gcn_forward_impl.1} parent=87 // pred_check
        %p1409 = pneg %p334
      $region90: #{_gcn_forward_impl.1} parent=87 // pred_check_branch
        %1411 = sbr.rel (%p1409) target = $region92
      $region91: #{_gcn_forward_impl.1} parent=87 // pred_region
        %p1412 = scmp.lt.s32.totalorder %s28, 1
        %s1413 = scalar_select %p1412, %s28, 1
        %s1414 = smul.addr %s1413, 8
        %s1415 = scalar_lea.vmem %s13, %s1414
      $region92: #{_gcn_forward_impl.1} parent=87 // pred_fallthru
        _
      // Predicated region
      $region93: #{_gcn_forward_impl.1} parent=87 // pred_check
        %p1416 = pneg %p360
      $region94: #{_gcn_forward_impl.1} parent=87 // pred_check_branch
        %1418 = sbr.rel (%p1416) target = $region96
      $region95: #{_gcn_forward_impl.1} parent=87 // pred_region
        %p1419 = scmp.lt.s32.totalorder %s28, 1
        %s1420 = scalar_select %p1419, %s28, 1
        %s1421 = smul.addr %s1420, 8
        %s1422 = scalar_lea.vmem %s14, %s1421
      $region96: #{_gcn_forward_impl.1} parent=87 // pred_fallthru
        _
      // Predicated region
      $region97: #{_gcn_forward_impl.1} parent=87 // pred_check
        %p1423 = pneg %p386
      $region98: #{_gcn_forward_impl.1} parent=87 // pred_check_branch
        %1425 = sbr.rel (%p1423) target = $region100
      $region99: #{_gcn_forward_impl.1} parent=87 // pred_region
        %p1426 = scmp.lt.s32.totalorder %s28, 1
        %s1427 = scalar_select %p1426, %s28, 1
        %s1428 = smul.addr %s1427, 2
        %s1429 = smul.addr %s1428, 8
        %s1430 = scalar_lea.vmem %s15, %s1429
      $region100: #{_gcn_forward_impl.1} parent=87 // pred_fallthru
        _
    $region88: #{_gcn_forward_impl.1} parent=5 // pred_fallthru
      _
  $region6: #{_gcn_forward_impl.1} parent=0 // loop_footer
    %s26 = sadd.s32 1, %s22
  $region7: #{_gcn_forward_impl.1} parent=0 // loop_footer_branch
    %21 = sbr.rel target = $region3
  $region8: #{_gcn_forward_impl.1} parent=0 // loop_exit
    _

</llo_original>
